<compile_context>
chip_gen: v6e
topology: v6e:2x2x1
jax: 0.10.0
libtpu: 0.0.40
codegen_flags: <defaults>
</compile_context>

<pallas_src>
import functools

import numpy as np
import jax
import jax.numpy as jnp
from jax import lax
from jax.experimental import pallas as pl
from jax.experimental.pallas import tpu as pltpu


def _round_up(x, m):
    return (x + m - 1) // m * m


# ----------------------------------------------------------------------------
# Kernels
# ----------------------------------------------------------------------------
def _im2col(xp_ref, xc_ref, K, Wp, Lo_pad, Cin):
    """Pack K*K taps along the contraction axis.

    xp_ref : (Cin, Lin)            channels-first, spatially flattened, padded
    xc_ref : (K*K*Cin, Lo_pad)     im2col scratch (transposed / lane-dense)
    Row t*Cin+ci of xc holds xp[ci, m + kh*Wp + kw] for wide output column m.
    The lane shift per tap is paid once here; the matmul below is then a single
    deep-contraction MXU pass.
    """
    for t in range(K * K):
        kh, kw = divmod(t, K)
        s = kh * Wp + kw                                  # static offsets
        xc_ref[t * Cin:(t + 1) * Cin, :] = xp_ref[:, s:s + Lo_pad]


def _convt_kernel(xp_ref, w_ref, b_ref, o_ref, xc_ref, *, K, Wp, Lo_pad, Cin):
    """ConvTranspose2d(stride=1) + bias, transposed (Cout, Lo_pad) output."""
    _im2col(xp_ref, xc_ref, K, Wp, Lo_pad, Cin)
    acc = jnp.dot(w_ref[...], xc_ref[...], preferred_element_type=jnp.float32)
    o_ref[...] = (acc + b_ref[...]).astype(o_ref.dtype)   # one unmasked store


def _convt_res_kernel(xp_ref, w_ref, b_ref, res_ref, o_ref, xc_ref,
                      *, K, Wp, Lo_pad, Cin):
    """ConvTranspose2d(stride=1) + bias + fused residual add."""
    _im2col(xp_ref, xc_ref, K, Wp, Lo_pad, Cin)
    acc = jnp.dot(w_ref[...], xc_ref[...], preferred_element_type=jnp.float32)
    acc = acc + b_ref[...] + res_ref[:, :Lo_pad].astype(jnp.float32)
    o_ref[...] = acc.astype(o_ref.dtype)                   # one unmasked store


def _add_kernel(a_ref, b_ref, o_ref):
    o_ref[...] = a_ref[...].astype(o_ref.dtype) + b_ref[...].astype(o_ref.dtype)


# ----------------------------------------------------------------------------
# ConvTranspose2d wrapper (channels-first end-to-end, no transposes)
# ----------------------------------------------------------------------------
def _convt_pallas(x_nchw, w_pt, b, residual_nchw, padding, use_bf16=True):
    """PyTorch ConvTranspose2d(Cin, Cout, K, stride=1, padding)(x) [+ residual].

    x_nchw: (N, Cin, H, W); w_pt: (Cin, Cout, K, K) [PyTorch layout]; b: (Cout,)
    residual_nchw: (N, Cout, Ho, Wo) or None.  Returns (N, Cout, Ho, Wo).
    """
    N, Cin, H, W = x_nchw.shape
    Cout, K = w_pt.shape[1], w_pt.shape[2]
    pad = K - 1 - padding                 # stride=1 transpose == padded VALID conv
    Hp, Wp = H + 2 * pad, W + 2 * pad
    Ho, Wo = Hp - K + 1, Wp - K + 1
    Lo = Ho * Wp                          # valid wide rows (m = i*Wp + j)
    Lo_pad = _round_up(Lo, 128)           # lane-dense output width (unmasked vst)
    max_shift = (K - 1) * (Wp + 1)
    Lp = Lo_pad + max_shift               # flat input columns the kernel reads
    extra_h = -(-max(Lp - Hp * Wp, 0) // Wp)
    Lin = (Hp + extra_h) * Wp             # flat input columns provided

    op_dtype = jnp.bfloat16 if use_bf16 else x_nchw.dtype

    # Channels-first throughout: ONE pad (spatial + tail rows) + contiguous
    # reshape + operand cast is the only XLA-side input plumbing.
    xp = jnp.pad(x_nchw, ((0, 0), (0, 0), (pad, pad + extra_h), (pad, pad)))
    xp_flat = xp.reshape(N, Cin, Lin).astype(op_dtype)

    # W_cat[co, (kh*K+kw)*Cin + ci] = w_pt[ci, co, K-1-kh, K-1-kw]
    w_f = jnp.flip(w_pt, axis=(2, 3))
    wcat = jnp.transpose(w_f, (1, 2, 3, 0)).reshape(Cout, K * K * Cin)
    wcat = wcat.astype(op_dtype)
    b2 = b.reshape(Cout, 1).astype(jnp.float32)

    in_specs = [
        pl.BlockSpec((None, Cin, Lin), lambda n: (n, 0, 0)),
        pl.BlockSpec((Cout, K * K * Cin), lambda n: (0, 0)),
        pl.BlockSpec((Cout, 1), lambda n: (0, 0)),
    ]
    args = [xp_flat, wcat, b2]

    if residual_nchw is None:
        kernel = functools.partial(_convt_kernel, K=K, Wp=Wp, Lo_pad=Lo_pad,
                                   Cin=Cin)
        out_dtype = x_nchw.dtype
    else:
        kernel = functools.partial(_convt_res_kernel, K=K, Wp=Wp, Lo_pad=Lo_pad,
                                   Cin=Cin)
        out_dtype = jnp.promote_types(x_nchw.dtype, residual_nchw.dtype)
        # residual (N, Cout, Ho, Wo) -> wide channel-first (N, Cout, Ho_ext*Wp)
        Ho_ext = -(-Lo_pad // Wp)
        res = jnp.pad(residual_nchw,
                      ((0, 0), (0, 0), (0, Ho_ext - Ho), (0, Wp - Wo)))
        args.append(res.reshape(N, Cout, Ho_ext * Wp))
        in_specs.append(pl.BlockSpec((None, Cout, Ho_ext * Wp),
                                     lambda n: (n, 0, 0)))

    out_wide = pl.pallas_call(
        kernel,
        out_shape=jax.ShapeDtypeStruct((N, Cout, Lo_pad), out_dtype),
        grid=(N,),
        in_specs=in_specs,
        out_specs=pl.BlockSpec((None, Cout, Lo_pad), lambda n: (n, 0, 0)),
        scratch_shapes=[pltpu.VMEM((K * K * Cin, Lo_pad), op_dtype)],
        compiler_params=pltpu.CompilerParams(
            dimension_semantics=("parallel",)),
    )(*args)

    # Already channel-first: drop invalid wide columns, no transpose needed.
    out = out_wide[:, :, :Lo].reshape(N, Cout, Ho, Wp)[:, :, :, :Wo]
    return out


def conv_transpose2d(x_nchw, w_pt, b, padding, use_bf16=True):
    """Plain ConvTranspose2d (no residual) — no zeros tensor is DMA'd."""
    return _convt_pallas(x_nchw, w_pt, b, None, padding, use_bf16)


def conv_transpose2d_add(x_nchw, w_pt, b, residual_nchw, padding, use_bf16=True):
    """ConvTranspose2d(x) + residual, fused into one Pallas kernel."""
    return _convt_pallas(x_nchw, w_pt, b, residual_nchw, padding, use_bf16)


# ----------------------------------------------------------------------------
# Elementwise residual add (shape-matching branch) — lane-dense, big blocks
# ----------------------------------------------------------------------------
def pallas_add(a, b):
    assert a.shape == b.shape
    out_dtype = jnp.promote_types(a.dtype, b.dtype)   # PyTorch-like promotion
    total = a.size
    cols = next((c for c in (4096, 2048, 1024, 512, 256, 128) if total % c == 0),
                None)
    if cols is None:
        return a.astype(out_dtype) + b.astype(out_dtype)   # odd sizes: XLA add
    rows = total // cols
    itemsize = max(a.dtype.itemsize, b.dtype.itemsize,
                   np.dtype(out_dtype).itemsize)
    max_rows = max(8, (4 << 20) // (cols * itemsize))  # ~4 MiB / operand block
    if rows <= max_rows:
        tr = rows                                      # whole array, one block
    else:
        tr = next((r for r in (1024, 512, 256, 128, 64, 32, 16, 8)
                   if r <= max_rows and rows % r == 0), None)
        if tr is None:
            return a.astype(out_dtype) + b.astype(out_dtype)
    a2, b2 = a.reshape(rows, cols), b.reshape(rows, cols)
    spec = pl.BlockSpec((tr, cols), lambda i: (i, 0))
    out = pl.pallas_call(
        _add_kernel,
        out_shape=jax.ShapeDtypeStruct((rows, cols), out_dtype),
        grid=(rows // tr,),
        in_specs=[spec, spec],
        out_specs=spec,
        compiler_params=pltpu.CompilerParams(
            dimension_semantics=("parallel",),
            vmem_limit_bytes=32 << 20),   # v5e default scoped VMEM is only 16 MiB
    )(a2, b2)
    return out.reshape(a.shape)


# ----------------------------------------------------------------------------
# Residual.forward
# ----------------------------------------------------------------------------
def residual_forward(params, inner_fn, x, use_bf16=True):
    """Exact Residual.forward semantics."""
    out = inner_fn(x)
    if out.shape[2] != x.shape[2] or out.shape[3] != x.shape[3]:
        # x = convtranspose(x); return x + out  -> fused in one Pallas kernel.
        return conv_transpose2d_add(x, params["w_ct"], params["b_ct"], out,
                                    padding=1, use_bf16=use_bf16)
    # TODO(synk): when inner_fn is itself a Pallas kernel, fuse this add into
    # its epilogue (as _convt_res_kernel does) instead of a standalone pass.
    return pallas_add(x, out)


# ----------------------------------------------------------------------------
# Demo / check
# ----------------------------------------------------------------------------
def _ref_convt(x, w_pt, b, padding):
    """XLA reference for PyTorch ConvTranspose2d(stride=1)."""
    K = w_pt.shape[2]
    pad = K - 1 - padding
    w_oihw = jnp.transpose(jnp.flip(w_pt, axis=(2, 3)), (1, 0, 2, 3))
    y = lax.conv_general_dilated(
        x, w_oihw, window_strides=(1, 1),
        padding=[(pad, pad), (pad, pad)],
        dimension_numbers=("NCHW", "OIHW", "NCHW"),
        precision=lax.Precision.HIGHEST)
    return y + b[None, :, None, None]


if __name__ == "__main__":
    key = jax.random.PRNGKey(0)
    kx, kw1, kb1, kw2, kb2 = jax.random.split(key, 5)

    # ConvTranspose2d(32, 32, 4, stride=1, padding=1) requires 32 input channels.
    x = jax.random.normal(kx, (2, 32, 16, 16), jnp.float32)

    # Residual's own ConvTranspose2d(32, 32, 4, stride=1, padding=1) parameters.
    params = {
        "w_ct": 0.05 * jax.random.normal(kw1, (32, 32, 4, 4), jnp.float32),
        "b_ct": 0.05 * jax.random.normal(kb1, (32,), jnp.float32),
    }
    # Wrapped inner module: spatial-size-changing ConvTranspose2d(32,32,2,1,0)
    # (also a Pallas kernel) so the shape-mismatch branch is exercised.
    w_in = 0.05 * jax.random.normal(kw2, (32, 32, 2, 2), jnp.float32)
    b_in = 0.05 * jax.random.normal(kb2, (32,), jnp.float32)

    y_ref = _ref_convt(x, params["w_ct"], params["b_ct"], 1) + _ref_convt(
        x, w_in, b_in, 0)

    # Default (bf16 MXU operands, f32 accumulate) path.
    inner_fn = lambda t: conv_transpose2d(t, w_in, b_in, padding=0)
    fwd = jax.jit(functools.partial(residual_forward, params, inner_fn))
    y = jax.block_until_ready(fwd(x))
    assert y.shape == (2, 32, 17, 17), y.shape
    err = float(jnp.max(jnp.abs(y - y_ref)))
    assert err < 1e-1, err

    # Exact f32-operand path.
    inner_f32 = lambda t: conv_transpose2d(t, w_in, b_in, padding=0,
                                           use_bf16=False)
    fwd32 = jax.jit(functools.partial(residual_forward, params, inner_f32,
                                      use_bf16=False))
    y32 = jax.block_until_ready(fwd32(x))
    err32 = float(jnp.max(jnp.abs(y32 - y_ref)))
    assert err32 < 5e-2, err32

    # Shape-matching branch (identity inner module) -> lane-dense Pallas add.
    y_same = jax.block_until_ready(
        jax.jit(functools.partial(residual_forward, params, lambda t: t))(x))
    assert y_same.shape == x.shape
    assert float(jnp.max(jnp.abs(y_same - 2.0 * x))) < 1e-5

    print("KERNEL_OK")
</pallas_src>

<mosaic_0001>
module attributes {stable_mosaic.version = 11 : i64} {
  func.func @_convt_kernel(%arg0: i32, %arg1: memref<1x32x414xbf16, #tpu.memory_space<vmem>>, %arg2: memref<32x128xbf16, #tpu.memory_space<vmem>>, %arg3: memref<32x1xf32, #tpu.memory_space<vmem>>, %arg4: memref<1x32x384xf32, #tpu.memory_space<vmem>>, %arg5: memref<128x384xbf16, #tpu.memory_space<vmem>>) attributes {dimension_semantics = [#tpu.dimension_semantics<parallel>], iteration_bounds = array<i64: 2>, scalar_prefetch = 0 : i64, scratch_operands = 1 : i64, tpu.core_type = #tpu.core_type<tc>, window_params = [{transform_indices = @transform_0, window_bounds = array<i64: 1, 32, 414>}, {pipeline_mode = #tpu.pipeline_mode<synchronous>, transform_indices = @transform_1, window_bounds = array<i64: 32, 128>}, {pipeline_mode = #tpu.pipeline_mode<synchronous>, transform_indices = @transform_2, window_bounds = array<i64: 32, 1>}, {transform_indices = @transform_3, window_bounds = array<i64: 1, 32, 384>}]} {
    %c0 = arith.constant 0 : index
    %c0_0 = arith.constant 0 : index
    %c0_1 = arith.constant 0 : index
    %0 = vector.load %arg1[%c0, %c0_0, %c0_1] : memref<1x32x414xbf16, #tpu.memory_space<vmem>>, vector<1x32x384xbf16>
    %1 = vector.shape_cast %0 : vector<1x32x384xbf16> to vector<32x384xbf16>
    %c0_2 = arith.constant 0 : index
    %c0_3 = arith.constant 0 : index
    %2 = vector.load %arg5[%c0_2, %c0_3] : memref<128x384xbf16, #tpu.memory_space<vmem>>, vector<32x384xbf16>
    tpu.vector_store %arg5[%c0_2, %c0_3], %1 {strides = array<i32>} : memref<128x384xbf16, #tpu.memory_space<vmem>>, vector<32x384xbf16>,
    %c0_4 = arith.constant 0 : index
    %c0_5 = arith.constant 0 : index
    %c1 = arith.constant 1 : index
    %3 = vector.load %arg1[%c0_4, %c0_5, %c1] : memref<1x32x414xbf16, #tpu.memory_space<vmem>>, vector<1x32x384xbf16>
    %4 = vector.shape_cast %3 : vector<1x32x384xbf16> to vector<32x384xbf16>
    %c32 = arith.constant 32 : index
    %c0_6 = arith.constant 0 : index
    %5 = vector.load %arg5[%c32, %c0_6] : memref<128x384xbf16, #tpu.memory_space<vmem>>, vector<32x384xbf16>
    tpu.vector_store %arg5[%c32, %c0_6], %4 {strides = array<i32>} : memref<128x384xbf16, #tpu.memory_space<vmem>>, vector<32x384xbf16>,
    %c0_7 = arith.constant 0 : index
    %c0_8 = arith.constant 0 : index
    %c18 = arith.constant 18 : index
    %6 = vector.load %arg1[%c0_7, %c0_8, %c18] : memref<1x32x414xbf16, #tpu.memory_space<vmem>>, vector<1x32x384xbf16>
    %7 = vector.shape_cast %6 : vector<1x32x384xbf16> to vector<32x384xbf16>
    %c64 = arith.constant 64 : index
    %c0_9 = arith.constant 0 : index
    %8 = vector.load %arg5[%c64, %c0_9] : memref<128x384xbf16, #tpu.memory_space<vmem>>, vector<32x384xbf16>
    tpu.vector_store %arg5[%c64, %c0_9], %7 {strides = array<i32>} : memref<128x384xbf16, #tpu.memory_space<vmem>>, vector<32x384xbf16>,
    %c0_10 = arith.constant 0 : index
    %c0_11 = arith.constant 0 : index
    %c19 = arith.constant 19 : index
    %9 = vector.load %arg1[%c0_10, %c0_11, %c19] : memref<1x32x414xbf16, #tpu.memory_space<vmem>>, vector<1x32x384xbf16>
    %10 = vector.shape_cast %9 : vector<1x32x384xbf16> to vector<32x384xbf16>
    %c96 = arith.constant 96 : index
    %c0_12 = arith.constant 0 : index
    %11 = vector.load %arg5[%c96, %c0_12] : memref<128x384xbf16, #tpu.memory_space<vmem>>, vector<32x384xbf16>
    tpu.vector_store %arg5[%c96, %c0_12], %10 {strides = array<i32>} : memref<128x384xbf16, #tpu.memory_space<vmem>>, vector<32x384xbf16>,
    %c0_13 = arith.constant 0 : index
    %c0_14 = arith.constant 0 : index
    %12 = vector.load %arg2[%c0_13, %c0_14] : memref<32x128xbf16, #tpu.memory_space<vmem>>, vector<32x128xbf16>
    %c0_15 = arith.constant 0 : index
    %c0_16 = arith.constant 0 : index
    %13 = vector.load %arg5[%c0_15, %c0_16] : memref<128x384xbf16, #tpu.memory_space<vmem>>, vector<128x384xbf16>
    %cst = arith.constant dense<0.000000e+00> : vector<32x384xf32>
    %14 = tpu.matmul %12, %13, %cst {dimension_numbers = #tpu.dot_dimension_numbers<[1], [0], [0], [1], [0, 0, 1, 1], [], []>} : vector<32x128xbf16>, vector<128x384xbf16>, vector<32x384xf32> -> vector<32x384xf32>
    %c0_17 = arith.constant 0 : index
    %c0_18 = arith.constant 0 : index
    %15 = vector.load %arg3[%c0_17, %c0_18] : memref<32x1xf32, #tpu.memory_space<vmem>>, vector<32x1xf32>
    %16 = vector.broadcast %15 : vector<32x1xf32> to vector<32x384xf32>
    %17 = arith.addf %14, %16 : vector<32x384xf32>
    %c0_19 = arith.constant 0 : index
    %c0_20 = arith.constant 0 : index
    %c0_21 = arith.constant 0 : index
    %18 = vector.load %arg4[%c0_19, %c0_20, %c0_21] : memref<1x32x384xf32, #tpu.memory_space<vmem>>, vector<1x32x384xf32>
    %19 = vector.shape_cast %18 : vector<1x32x384xf32> to vector<32x384xf32>
    %20 = vector.shape_cast %17 : vector<32x384xf32> to vector<1x32x384xf32>
    tpu.vector_store %arg4[%c0_19, %c0_20, %c0_21], %20 {strides = array<i32>} : memref<1x32x384xf32, #tpu.memory_space<vmem>>, vector<1x32x384xf32>,
    return
  }
  func.func @transform_0(%arg0: i32) -> (i32, i32, i32) {
    %c0_i32 = arith.constant 0 : i32
    %c0_i32_0 = arith.constant 0 : i32
    %c0_i32_1 = arith.constant 0 : i32
    return %arg0, %c0_i32, %c0_i32_0 : i32, i32, i32
  }
  func.func @transform_1(%arg0: i32) -> (i32, i32) {
    %c0_i32 = arith.constant 0 : i32
    %c0_i32_0 = arith.constant 0 : i32
    %c0_i32_1 = arith.constant 0 : i32
    return %c0_i32, %c0_i32_0 : i32, i32
  }
  func.func @transform_2(%arg0: i32) -> (i32, i32) {
    %c0_i32 = arith.constant 0 : i32
    %c0_i32_0 = arith.constant 0 : i32
    %c0_i32_1 = arith.constant 0 : i32
    return %c0_i32, %c0_i32_0 : i32, i32
  }
  func.func @transform_3(%arg0: i32) -> (i32, i32, i32) {
    %c0_i32 = arith.constant 0 : i32
    %c0_i32_0 = arith.constant 0 : i32
    %c0_i32_1 = arith.constant 0 : i32
    return %arg0, %c0_i32, %c0_i32_0 : i32, i32, i32
  }
}

module attributes {stable_mosaic.version = 11 : i64} {
  func.func @_convt_res_kernel(%arg0: i32, %arg1: memref<1x32x460xbf16, #tpu.memory_space<vmem>>, %arg2: memref<32x512xbf16, #tpu.memory_space<vmem>>, %arg3: memref<32x1xf32, #tpu.memory_space<vmem>>, %arg4: memref<1x32x400xf32, #tpu.memory_space<vmem>>, %arg5: memref<1x32x384xf32, #tpu.memory_space<vmem>>, %arg6: memref<512x384xbf16, #tpu.memory_space<vmem>>) attributes {dimension_semantics = [#tpu.dimension_semantics<parallel>], iteration_bounds = array<i64: 2>, scalar_prefetch = 0 : i64, scratch_operands = 1 : i64, tpu.core_type = #tpu.core_type<tc>, window_params = [{transform_indices = @transform_0, window_bounds = array<i64: 1, 32, 460>}, {pipeline_mode = #tpu.pipeline_mode<synchronous>, transform_indices = @transform_1, window_bounds = array<i64: 32, 512>}, {pipeline_mode = #tpu.pipeline_mode<synchronous>, transform_indices = @transform_2, window_bounds = array<i64: 32, 1>}, {transform_indices = @transform_3, window_bounds = array<i64: 1, 32, 400>}, {transform_indices = @transform_4, window_bounds = array<i64: 1, 32, 384>}]} {
    %c0 = arith.constant 0 : index
    %c0_0 = arith.constant 0 : index
    %c0_1 = arith.constant 0 : index
    %0 = vector.load %arg1[%c0, %c0_0, %c0_1] : memref<1x32x460xbf16, #tpu.memory_space<vmem>>, vector<1x32x384xbf16>
    %1 = vector.shape_cast %0 : vector<1x32x384xbf16> to vector<32x384xbf16>
    %c0_2 = arith.constant 0 : index
    %c0_3 = arith.constant 0 : index
    %2 = vector.load %arg6[%c0_2, %c0_3] : memref<512x384xbf16, #tpu.memory_space<vmem>>, vector<32x384xbf16>
    tpu.vector_store %arg6[%c0_2, %c0_3], %1 {strides = array<i32>} : memref<512x384xbf16, #tpu.memory_space<vmem>>, vector<32x384xbf16>,
    %c0_4 = arith.constant 0 : index
    %c0_5 = arith.constant 0 : index
    %c1 = arith.constant 1 : index
    %3 = vector.load %arg1[%c0_4, %c0_5, %c1] : memref<1x32x460xbf16, #tpu.memory_space<vmem>>, vector<1x32x384xbf16>
    %4 = vector.shape_cast %3 : vector<1x32x384xbf16> to vector<32x384xbf16>
    %c32 = arith.constant 32 : index
    %c0_6 = arith.constant 0 : index
    %5 = vector.load %arg6[%c32, %c0_6] : memref<512x384xbf16, #tpu.memory_space<vmem>>, vector<32x384xbf16>
    tpu.vector_store %arg6[%c32, %c0_6], %4 {strides = array<i32>} : memref<512x384xbf16, #tpu.memory_space<vmem>>, vector<32x384xbf16>,
    %c0_7 = arith.constant 0 : index
    %c0_8 = arith.constant 0 : index
    %c2 = arith.constant 2 : index
    %6 = vector.load %arg1[%c0_7, %c0_8, %c2] : memref<1x32x460xbf16, #tpu.memory_space<vmem>>, vector<1x32x384xbf16>
    %7 = vector.shape_cast %6 : vector<1x32x384xbf16> to vector<32x384xbf16>
    %c64 = arith.constant 64 : index
    %c0_9 = arith.constant 0 : index
    %8 = vector.load %arg6[%c64, %c0_9] : memref<512x384xbf16, #tpu.memory_space<vmem>>, vector<32x384xbf16>
    tpu.vector_store %arg6[%c64, %c0_9], %7 {strides = array<i32>} : memref<512x384xbf16, #tpu.memory_space<vmem>>, vector<32x384xbf16>,
    %c0_10 = arith.constant 0 : index
    %c0_11 = arith.constant 0 : index
    %c3 = arith.constant 3 : index
    %9 = vector.load %arg1[%c0_10, %c0_11, %c3] : memref<1x32x460xbf16, #tpu.memory_space<vmem>>, vector<1x32x384xbf16>
    %10 = vector.shape_cast %9 : vector<1x32x384xbf16> to vector<32x384xbf16>
    %c96 = arith.constant 96 : index
    %c0_12 = arith.constant 0 : index
    %11 = vector.load %arg6[%c96, %c0_12] : memref<512x384xbf16, #tpu.memory_space<vmem>>, vector<32x384xbf16>
    tpu.vector_store %arg6[%c96, %c0_12], %10 {strides = array<i32>} : memref<512x384xbf16, #tpu.memory_space<vmem>>, vector<32x384xbf16>,
    %c0_13 = arith.constant 0 : index
    %c0_14 = arith.constant 0 : index
    %c20 = arith.constant 20 : index
    %12 = vector.load %arg1[%c0_13, %c0_14, %c20] : memref<1x32x460xbf16, #tpu.memory_space<vmem>>, vector<1x32x384xbf16>
    %13 = vector.shape_cast %12 : vector<1x32x384xbf16> to vector<32x384xbf16>
    %c128 = arith.constant 128 : index
    %c0_15 = arith.constant 0 : index
    %14 = vector.load %arg6[%c128, %c0_15] : memref<512x384xbf16, #tpu.memory_space<vmem>>, vector<32x384xbf16>
    tpu.vector_store %arg6[%c128, %c0_15], %13 {strides = array<i32>} : memref<512x384xbf16, #tpu.memory_space<vmem>>, vector<32x384xbf16>,
    %c0_16 = arith.constant 0 : index
    %c0_17 = arith.constant 0 : index
    %c21 = arith.constant 21 : index
    %15 = vector.load %arg1[%c0_16, %c0_17, %c21] : memref<1x32x460xbf16, #tpu.memory_space<vmem>>, vector<1x32x384xbf16>
    %16 = vector.shape_cast %15 : vector<1x32x384xbf16> to vector<32x384xbf16>
    %c160 = arith.constant 160 : index
    %c0_18 = arith.constant 0 : index
    %17 = vector.load %arg6[%c160, %c0_18] : memref<512x384xbf16, #tpu.memory_space<vmem>>, vector<32x384xbf16>
    tpu.vector_store %arg6[%c160, %c0_18], %16 {strides = array<i32>} : memref<512x384xbf16, #tpu.memory_space<vmem>>, vector<32x384xbf16>,
    %c0_19 = arith.constant 0 : index
    %c0_20 = arith.constant 0 : index
    %c22 = arith.constant 22 : index
    %18 = vector.load %arg1[%c0_19, %c0_20, %c22] : memref<1x32x460xbf16, #tpu.memory_space<vmem>>, vector<1x32x384xbf16>
    %19 = vector.shape_cast %18 : vector<1x32x384xbf16> to vector<32x384xbf16>
    %c192 = arith.constant 192 : index
    %c0_21 = arith.constant 0 : index
    %20 = vector.load %arg6[%c192, %c0_21] : memref<512x384xbf16, #tpu.memory_space<vmem>>, vector<32x384xbf16>
    tpu.vector_store %arg6[%c192, %c0_21], %19 {strides = array<i32>} : memref<512x384xbf16, #tpu.memory_space<vmem>>, vector<32x384xbf16>,
    %c0_22 = arith.constant 0 : index
    %c0_23 = arith.constant 0 : index
    %c23 = arith.constant 23 : index
    %21 = vector.load %arg1[%c0_22, %c0_23, %c23] : memref<1x32x460xbf16, #tpu.memory_space<vmem>>, vector<1x32x384xbf16>
    %22 = vector.shape_cast %21 : vector<1x32x384xbf16> to vector<32x384xbf16>
    %c224 = arith.constant 224 : index
    %c0_24 = arith.constant 0 : index
    %23 = vector.load %arg6[%c224, %c0_24] : memref<512x384xbf16, #tpu.memory_space<vmem>>, vector<32x384xbf16>
    tpu.vector_store %arg6[%c224, %c0_24], %22 {strides = array<i32>} : memref<512x384xbf16, #tpu.memory_space<vmem>>, vector<32x384xbf16>,
    %c0_25 = arith.constant 0 : index
    %c0_26 = arith.constant 0 : index
    %c40 = arith.constant 40 : index
    %24 = vector.load %arg1[%c0_25, %c0_26, %c40] : memref<1x32x460xbf16, #tpu.memory_space<vmem>>, vector<1x32x384xbf16>
    %25 = vector.shape_cast %24 : vector<1x32x384xbf16> to vector<32x384xbf16>
    %c256 = arith.constant 256 : index
    %c0_27 = arith.constant 0 : index
    %26 = vector.load %arg6[%c256, %c0_27] : memref<512x384xbf16, #tpu.memory_space<vmem>>, vector<32x384xbf16>
    tpu.vector_store %arg6[%c256, %c0_27], %25 {strides = array<i32>} : memref<512x384xbf16, #tpu.memory_space<vmem>>, vector<32x384xbf16>,
    %c0_28 = arith.constant 0 : index
    %c0_29 = arith.constant 0 : index
    %c41 = arith.constant 41 : index
    %27 = vector.load %arg1[%c0_28, %c0_29, %c41] : memref<1x32x460xbf16, #tpu.memory_space<vmem>>, vector<1x32x384xbf16>
    %28 = vector.shape_cast %27 : vector<1x32x384xbf16> to vector<32x384xbf16>
    %c288 = arith.constant 288 : index
    %c0_30 = arith.constant 0 : index
    %29 = vector.load %arg6[%c288, %c0_30] : memref<512x384xbf16, #tpu.memory_space<vmem>>, vector<32x384xbf16>
    tpu.vector_store %arg6[%c288, %c0_30], %28 {strides = array<i32>} : memref<512x384xbf16, #tpu.memory_space<vmem>>, vector<32x384xbf16>,
    %c0_31 = arith.constant 0 : index
    %c0_32 = arith.constant 0 : index
    %c42 = arith.constant 42 : index
    %30 = vector.load %arg1[%c0_31, %c0_32, %c42] : memref<1x32x460xbf16, #tpu.memory_space<vmem>>, vector<1x32x384xbf16>
    %31 = vector.shape_cast %30 : vector<1x32x384xbf16> to vector<32x384xbf16>
    %c320 = arith.constant 320 : index
    %c0_33 = arith.constant 0 : index
    %32 = vector.load %arg6[%c320, %c0_33] : memref<512x384xbf16, #tpu.memory_space<vmem>>, vector<32x384xbf16>
    tpu.vector_store %arg6[%c320, %c0_33], %31 {strides = array<i32>} : memref<512x384xbf16, #tpu.memory_space<vmem>>, vector<32x384xbf16>,
    %c0_34 = arith.constant 0 : index
    %c0_35 = arith.constant 0 : index
    %c43 = arith.constant 43 : index
    %33 = vector.load %arg1[%c0_34, %c0_35, %c43] : memref<1x32x460xbf16, #tpu.memory_space<vmem>>, vector<1x32x384xbf16>
    %34 = vector.shape_cast %33 : vector<1x32x384xbf16> to vector<32x384xbf16>
    %c352 = arith.constant 352 : index
    %c0_36 = arith.constant 0 : index
    %35 = vector.load %arg6[%c352, %c0_36] : memref<512x384xbf16, #tpu.memory_space<vmem>>, vector<32x384xbf16>
    tpu.vector_store %arg6[%c352, %c0_36], %34 {strides = array<i32>} : memref<512x384xbf16, #tpu.memory_space<vmem>>, vector<32x384xbf16>,
    %c0_37 = arith.constant 0 : index
    %c0_38 = arith.constant 0 : index
    %c60 = arith.constant 60 : index
    %36 = vector.load %arg1[%c0_37, %c0_38, %c60] : memref<1x32x460xbf16, #tpu.memory_space<vmem>>, vector<1x32x384xbf16>
    %37 = vector.shape_cast %36 : vector<1x32x384xbf16> to vector<32x384xbf16>
    %c384 = arith.constant 384 : index
    %c0_39 = arith.constant 0 : index
    %38 = vector.load %arg6[%c384, %c0_39] : memref<512x384xbf16, #tpu.memory_space<vmem>>, vector<32x384xbf16>
    tpu.vector_store %arg6[%c384, %c0_39], %37 {strides = array<i32>} : memref<512x384xbf16, #tpu.memory_space<vmem>>, vector<32x384xbf16>,
    %c0_40 = arith.constant 0 : index
    %c0_41 = arith.constant 0 : index
    %c61 = arith.constant 61 : index
    %39 = vector.load %arg1[%c0_40, %c0_41, %c61] : memref<1x32x460xbf16, #tpu.memory_space<vmem>>, vector<1x32x384xbf16>
    %40 = vector.shape_cast %39 : vector<1x32x384xbf16> to vector<32x384xbf16>
    %c416 = arith.constant 416 : index
    %c0_42 = arith.constant 0 : index
    %41 = vector.load %arg6[%c416, %c0_42] : memref<512x384xbf16, #tpu.memory_space<vmem>>, vector<32x384xbf16>
    tpu.vector_store %arg6[%c416, %c0_42], %40 {strides = array<i32>} : memref<512x384xbf16, #tpu.memory_space<vmem>>, vector<32x384xbf16>,
    %c0_43 = arith.constant 0 : index
    %c0_44 = arith.constant 0 : index
    %c62 = arith.constant 62 : index
    %42 = vector.load %arg1[%c0_43, %c0_44, %c62] : memref<1x32x460xbf16, #tpu.memory_space<vmem>>, vector<1x32x384xbf16>
    %43 = vector.shape_cast %42 : vector<1x32x384xbf16> to vector<32x384xbf16>
    %c448 = arith.constant 448 : index
    %c0_45 = arith.constant 0 : index
    %44 = vector.load %arg6[%c448, %c0_45] : memref<512x384xbf16, #tpu.memory_space<vmem>>, vector<32x384xbf16>
    tpu.vector_store %arg6[%c448, %c0_45], %43 {strides = array<i32>} : memref<512x384xbf16, #tpu.memory_space<vmem>>, vector<32x384xbf16>,
    %c0_46 = arith.constant 0 : index
    %c0_47 = arith.constant 0 : index
    %c63 = arith.constant 63 : index
    %45 = vector.load %arg1[%c0_46, %c0_47, %c63] : memref<1x32x460xbf16, #tpu.memory_space<vmem>>, vector<1x32x384xbf16>
    %46 = vector.shape_cast %45 : vector<1x32x384xbf16> to vector<32x384xbf16>
    %c480 = arith.constant 480 : index
    %c0_48 = arith.constant 0 : index
    %47 = vector.load %arg6[%c480, %c0_48] : memref<512x384xbf16, #tpu.memory_space<vmem>>, vector<32x384xbf16>
    tpu.vector_store %arg6[%c480, %c0_48], %46 {strides = array<i32>} : memref<512x384xbf16, #tpu.memory_space<vmem>>, vector<32x384xbf16>,
    %c0_49 = arith.constant 0 : index
    %c0_50 = arith.constant 0 : index
    %48 = vector.load %arg2[%c0_49, %c0_50] : memref<32x512xbf16, #tpu.memory_space<vmem>>, vector<32x512xbf16>
    %c0_51 = arith.constant 0 : index
    %c0_52 = arith.constant 0 : index
    %49 = vector.load %arg6[%c0_51, %c0_52] : memref<512x384xbf16, #tpu.memory_space<vmem>>, vector<512x384xbf16>
    %cst = arith.constant dense<0.000000e+00> : vector<32x384xf32>
    %50 = tpu.matmul %48, %49, %cst {dimension_numbers = #tpu.dot_dimension_numbers<[1], [0], [0], [1], [0, 0, 1, 1], [], []>} : vector<32x512xbf16>, vector<512x384xbf16>, vector<32x384xf32> -> vector<32x384xf32>
    %c0_53 = arith.constant 0 : index
    %c0_54 = arith.constant 0 : index
    %51 = vector.load %arg3[%c0_53, %c0_54] : memref<32x1xf32, #tpu.memory_space<vmem>>, vector<32x1xf32>
    %52 = vector.broadcast %51 : vector<32x1xf32> to vector<32x384xf32>
    %53 = arith.addf %50, %52 : vector<32x384xf32>
    %c0_55 = arith.constant 0 : index
    %c0_56 = arith.constant 0 : index
    %c0_57 = arith.constant 0 : index
    %54 = vector.load %arg4[%c0_55, %c0_56, %c0_57] : memref<1x32x400xf32, #tpu.memory_space<vmem>>, vector<1x32x384xf32>
    %55 = vector.shape_cast %54 : vector<1x32x384xf32> to vector<32x384xf32>
    %56 = arith.addf %53, %55 : vector<32x384xf32>
    %c0_58 = arith.constant 0 : index
    %c0_59 = arith.constant 0 : index
    %c0_60 = arith.constant 0 : index
    %57 = vector.load %arg5[%c0_58, %c0_59, %c0_60] : memref<1x32x384xf32, #tpu.memory_space<vmem>>, vector<1x32x384xf32>
    %58 = vector.shape_cast %57 : vector<1x32x384xf32> to vector<32x384xf32>
    %59 = vector.shape_cast %56 : vector<32x384xf32> to vector<1x32x384xf32>
    tpu.vector_store %arg5[%c0_58, %c0_59, %c0_60], %59 {strides = array<i32>} : memref<1x32x384xf32, #tpu.memory_space<vmem>>, vector<1x32x384xf32>,
    return
  }
  func.func @transform_0(%arg0: i32) -> (i32, i32, i32) {
    %c0_i32 = arith.constant 0 : i32
    %c0_i32_0 = arith.constant 0 : i32
    %c0_i32_1 = arith.constant 0 : i32
    return %arg0, %c0_i32, %c0_i32_0 : i32, i32, i32
  }
  func.func @transform_1(%arg0: i32) -> (i32, i32) {
    %c0_i32 = arith.constant 0 : i32
    %c0_i32_0 = arith.constant 0 : i32
    %c0_i32_1 = arith.constant 0 : i32
    return %c0_i32, %c0_i32_0 : i32, i32
  }
  func.func @transform_2(%arg0: i32) -> (i32, i32) {
    %c0_i32 = arith.constant 0 : i32
    %c0_i32_0 = arith.constant 0 : i32
    %c0_i32_1 = arith.constant 0 : i32
    return %c0_i32, %c0_i32_0 : i32, i32
  }
  func.func @transform_3(%arg0: i32) -> (i32, i32, i32) {
    %c0_i32 = arith.constant 0 : i32
    %c0_i32_0 = arith.constant 0 : i32
    %c0_i32_1 = arith.constant 0 : i32
    return %arg0, %c0_i32, %c0_i32_0 : i32, i32, i32
  }
  func.func @transform_4(%arg0: i32) -> (i32, i32, i32) {
    %c0_i32 = arith.constant 0 : i32
    %c0_i32_0 = arith.constant 0 : i32
    %c0_i32_1 = arith.constant 0 : i32
    return %arg0, %c0_i32, %c0_i32_0 : i32, i32, i32
  }
}

</mosaic_0001>

<llo_original>
// kernel: residual_forward.2
$region0: #{residual_forward.2}
  #allocation0 [shape = 'u32[]', space=smem, size = 0x4, offset = 0x4, fixed_abs, tag = 'smem constant byte address 0x4 - core index']
  #allocation1 [shape = 'u32[144,128]{1,0:T(1,128)}', space=vmem, size = 0x12000, scoped, tag = 'internal scratch']
  #allocation2 [shape = 'bf16[128,384]{1,0:T(8,128)(2,1)}', space=vmem, size = 0x18000, scoped, tag = 'scratch operand']
  %s0 = inlined_call_operand.vmem [shape: bf16[2,32,414], index: 0, kind: input, shape index: {}]
  %s1 = inlined_call_operand.vmem [shape: bf16[32,128], index: 1, kind: input, shape index: {}]
  %s2 = inlined_call_operand.vmem [shape: f32[32,1], index: 2, kind: input, shape index: {}]
  %s3 = inlined_call_operand.vmem [shape: f32[2,32,384], index: 3, kind: output, shape index: {}]
  %s4 = sld [smem:[#allocation0]]
  $region45: #{residual_forward.2} parent=0
    _
  %s6 = ssub.s32 1, %s4
  %s7 = scalar_select 0, %s6, %s4
  loop: start=0, step=1, limit=4
  $region2: #{residual_forward.2} parent=0 // loop_pre_header
    _
  $region3: #{residual_forward.2} parent=0 // loop_header
    %s9 = sphi 0, %s13
    %p10 = scmp.ge.s32.totalorder %s9, 4
    %s19 = sphi 0, %s21
    %s22 = sphi 0, %s19
    %s23 = sphi 0, %s22
    %s39 = sphi 0, %s23
    %s43 = sphi 0, %s43
    %s45 = sphi 0, %s43
    %s46 = sphi 0, %s45
    %s60 = sphi 0, %s46
    %s64 = sphi 0, %s64
    %s66 = sphi 0, %s64
    %s67 = sphi 0, %s66
    %s81 = sphi 0, %s67
    %s87 = sphi 0, %s89
    %s90 = sphi 0, %s87
    %s91 = sphi 0, %s90
    %s107 = sphi 0, %s91
  $region4: #{residual_forward.2} parent=0 // loop_header_branch
    %12 = sbr.rel (%p10) target = $region8
  $region5: #{residual_forward.2} parent=0 // loop_body
    %s14 = ssub.s32 %s9, 1
    %s15 = ssub.s32 %s9, 2
    %s16 = sadd.s32 %s9, 1
    %s17 = ssub.s32 %s9, %s16
    %p18 = scmp.eq.s32.totalorder %s17, 0
    %s20 = sadd.s32 %s19, 1
    %s21 = scalar_select %p18, %s19, %s20
    %p24 = pneg %p18
    %p25 = scmp.eq.s32.totalorder %s9, 1
    %p26 = por %p24, %p25
    %p27 = scmp.ne.s32.totalorder %s19, %s22
    %p28 = scmp.eq.s32.totalorder %s9, 0
    %p29 = por %p27, %p28
    %p30 = scmp.ne.s32.totalorder %s19, %s22
    %p31 = scmp.eq.s32.totalorder %s14, 1
    %p32 = por %p30, %p31
    %p33 = scmp.ne.s32.totalorder %s22, %s23
    %p34 = scmp.eq.s32.totalorder %s14, 0
    %p35 = por %p33, %p34
    %p36 = scmp.ne.s32.totalorder %s22, %s23
    %p37 = scmp.eq.s32.totalorder %s15, 1
    %p38 = por %p36, %p37
    %p40 = scmp.ne.s32.totalorder %s23, %s39
    %p41 = scmp.eq.s32.totalorder %s15, 0
    %p42 = por %p40, %p41
    %s44 = sadd.s32 %s43, 1
    %p47 = scmp.eq.s32.totalorder %s9, 1
    %p48 = scmp.ne.s32.totalorder %s43, %s45
    %p49 = scmp.eq.s32.totalorder %s9, 0
    %p50 = por %p48, %p49
    %p51 = scmp.ne.s32.totalorder %s43, %s45
    %p52 = scmp.eq.s32.totalorder %s14, 1
    %p53 = por %p51, %p52
    %p54 = scmp.ne.s32.totalorder %s45, %s46
    %p55 = scmp.eq.s32.totalorder %s14, 0
    %p56 = por %p54, %p55
    %p57 = scmp.ne.s32.totalorder %s45, %s46
    %p58 = scmp.eq.s32.totalorder %s15, 1
    %p59 = por %p57, %p58
    %p61 = scmp.ne.s32.totalorder %s46, %s60
    %p62 = scmp.eq.s32.totalorder %s15, 0
    %p63 = por %p61, %p62
    %s65 = sadd.s32 %s64, 1
    %p68 = scmp.eq.s32.totalorder %s9, 1
    %p69 = scmp.ne.s32.totalorder %s64, %s66
    %p70 = scmp.eq.s32.totalorder %s9, 0
    %p71 = por %p69, %p70
    %p72 = scmp.ne.s32.totalorder %s64, %s66
    %p73 = scmp.eq.s32.totalorder %s14, 1
    %p74 = por %p72, %p73
    %p75 = scmp.ne.s32.totalorder %s66, %s67
    %p76 = scmp.eq.s32.totalorder %s14, 0
    %p77 = por %p75, %p76
    %p78 = scmp.ne.s32.totalorder %s66, %s67
    %p79 = scmp.eq.s32.totalorder %s15, 1
    %p80 = por %p78, %p79
    %p82 = scmp.ne.s32.totalorder %s67, %s81
    %p83 = scmp.eq.s32.totalorder %s15, 0
    %p84 = por %p82, %p83
    %s85 = ssub.s32 %s9, %s16
    %p86 = scmp.eq.s32.totalorder %s85, 0
    %s88 = sadd.s32 %s87, 1
    %s89 = scalar_select %p86, %s87, %s88
    %p92 = pneg %p86
    %p93 = scmp.eq.s32.totalorder %s9, 1
    %p94 = por %p92, %p93
    %p95 = scmp.ne.s32.totalorder %s87, %s90
    %p96 = scmp.eq.s32.totalorder %s9, 0
    %p97 = por %p95, %p96
    %p98 = scmp.ne.s32.totalorder %s87, %s90
    %p99 = scmp.eq.s32.totalorder %s14, 1
    %p100 = por %p98, %p99
    %p101 = scmp.ne.s32.totalorder %s90, %s91
    %p102 = scmp.eq.s32.totalorder %s14, 0
    %p103 = por %p101, %p102
    %p104 = scmp.ne.s32.totalorder %s90, %s91
    %p105 = scmp.eq.s32.totalorder %s15, 1
    %p106 = por %p104, %p105
    %p108 = scmp.ne.s32.totalorder %s91, %s107
    %p109 = scmp.eq.s32.totalorder %s15, 0
    %p110 = por %p108, %p109
    %p111 = scmp.le.s32.totalorder 1, %s9
    %p112 = scmp.lt.s32.totalorder %s9, 3
    %p113 = pnand %p111, %p112
    %p114 = pneg %p113
    // Predicated region
    $region9: #{residual_forward.2} parent=5 // pred_check
      _
    $region10: #{residual_forward.2} parent=5 // pred_check_branch
      %116 = sbr.rel (%p113) target = $region12
    $region11: #{residual_forward.2} parent=5 // pred_region
      %s117 = ssub.s32 %s9, 1
      // Predicated region
      $region13: #{residual_forward.2} parent=11 // pred_check
        %p118 = pneg %p56
      $region14: #{residual_forward.2} parent=11 // pred_check_branch
        %120 = sbr.rel (%p118) target = $region16
      $region15: #{residual_forward.2} parent=11 // pred_region
        _
      $region16: #{residual_forward.2} parent=11 // pred_fallthru
        _
      // Predicated region
      $region17: #{residual_forward.2} parent=11 // pred_check
        %p121 = pneg %p77
      $region18: #{residual_forward.2} parent=11 // pred_check_branch
        %123 = sbr.rel (%p121) target = $region20
      $region19: #{residual_forward.2} parent=11 // pred_region
        _
      $region20: #{residual_forward.2} parent=11 // pred_fallthru
        _
    $region12: #{residual_forward.2} parent=5 // pred_fallthru
      _
    %p124 = scmp.lt.s32.totalorder %s9, 2
    // Predicated region
    $region21: #{residual_forward.2} parent=5 // pred_check
      %p125 = pneg %p124
    $region22: #{residual_forward.2} parent=5 // pred_check_branch
      %127 = sbr.rel (%p125) target = $region24
    $region23: #{residual_forward.2} parent=5 // pred_region
      // Predicated region
      $region25: #{residual_forward.2} parent=23 // pred_check
        %p128 = pneg %p29
      $region26: #{residual_forward.2} parent=23 // pred_check_branch
        %130 = sbr.rel (%p128) target = $region28
      $region27: #{residual_forward.2} parent=23 // pred_region
        %p131 = scmp.lt.s32.totalorder %s9, 1
        %s132 = scalar_select %p131, %s9, 1
        %s133 = smul.addr %s132, 16
        %s134 = smul.addr %s133, 4
        %s135 = scalar_lea.vmem %s0, %s134
      $region28: #{residual_forward.2} parent=23 // pred_fallthru
        _
    $region24: #{residual_forward.2} parent=5 // pred_fallthru
      _
    %p136 = scmp.le.s32.totalorder 1, %s9
    %p137 = scmp.lt.s32.totalorder %s9, 3
    %p138 = pnand %p136, %p137
    %p139 = pneg %p138
    // Predicated region
    $region29: #{residual_forward.2} parent=5 // pred_check
      _
    $region30: #{residual_forward.2} parent=5 // pred_check_branch
      %141 = sbr.rel (%p138) target = $region32
    $region31: #{residual_forward.2} parent=5 // pred_region
      %s142 = ssub.s32 %s9, 1
      %p143 = scmp.lt.s32.totalorder %s14, 1
      %s144 = scalar_select %p143, %s14, 1
      %s145 = smul.addr %s144, 16
      %s146 = smul.addr %s145, 4
      %s147 = scalar_lea.vmem %s0, %s146
      %p148 = pneg %p35
      %p149 = pneg %p32
      %p150 = pneg %p56
      %p151 = pneg %p53
      %p152 = pneg %p77
      %p153 = pneg %p74
      %p154 = pneg %p103
      %p155 = pneg %p100
      %p156 = scmp.lt.s32.totalorder %s14, 1
      %s157 = scalar_select %p156, %s14, 1
      %s158 = smul.addr %s157, 12
      %s159 = smul.addr %s158, 8
      %s160 = scalar_lea.vmem %s3, %s159
      %p161 = scmp.lt.s32.totalorder %s14, 1
      %s162 = scalar_select %p161, %s14, 1
      %s163 = smul.addr %s162, 16
      %s164 = smul.addr %s163, 4
      %s165 = scalar_lea.vmem %s0, %s164
      %p166 = scmp.lt.s32.totalorder %s14, 1
      %s167 = scalar_select %p166, %s14, 1
      %s168 = smul.addr %s167, 12
      %s169 = smul.addr %s168, 8
      %s170 = scalar_lea.vmem %s3, %s169
      %v172 = vld [vmem:[%s165] sm:$0xff]
      %v173 = vld [vmem:[%s165 + $0x8] sm:$0xf]
      %v174 = vld [vmem:[%s165 + $0x10] sm:$0xff]
      %v175 = vld [vmem:[%s165 + $0x18] sm:$0xf]
      %v176 = vld [vmem:[%s165 + $0x20] sm:$0xff]
      %v177 = vld [vmem:[%s165 + $0x28] sm:$0xf]
      %v178 = vld [vmem:[%s165 + $0x30] sm:$0xff]
      %v179 = vld [vmem:[%s165 + $0x38] sm:$0xf]
      %180 = vst [vmem:[#allocation2] sm:$0xff] %v172
      %181 = vst [vmem:[#allocation2 + $0x8] sm:$0xf] %v173
      %182 = vst [vmem:[#allocation2 + $0xc] sm:$0xff] %v174
      %183 = vst [vmem:[#allocation2 + $0x14] sm:$0xf] %v175
      %184 = vst [vmem:[#allocation2 + $0x18] sm:$0xff] %v176
      %185 = vst [vmem:[#allocation2 + $0x20] sm:$0xf] %v177
      %186 = vst [vmem:[#allocation2 + $0x24] sm:$0xff] %v178
      %187 = vst [vmem:[#allocation2 + $0x2c] sm:$0xf] %v179
      %v188 = vld [vmem:[%s165] sm:$0xff]
      %v189 = vld [vmem:[%s165 + $0x8] sm:$0xff]
      %v190 = vld [vmem:[%s165 + $0x10] sm:$0xff]
      %v191 = vld [vmem:[%s165 + $0x18] sm:$0xff]
      %v192 = vld [vmem:[%s165 + $0x20] sm:$0xff]
      %v193 = vld [vmem:[%s165 + $0x28] sm:$0xff]
      %v194 = vld [vmem:[%s165 + $0x30] sm:$0xff]
      %v195 = vld [vmem:[%s165 + $0x38] sm:$0xff]
      %204 = vrot.lane.b32.xlu0 %v188, 127
      %v205 = vpop.permute.xlu0 %204
      %206 = vrot.lane.b32.xlu0 %v189, 127
      %v207 = vpop.permute.xlu0 %206
      %208 = vrot.lane.b32.xlu0 %v190, 127
      %v209 = vpop.permute.xlu0 %208
      %210 = vrot.lane.b32.xlu0 %v191, 127
      %v211 = vpop.permute.xlu0 %210
      %212 = vrot.lane.b32.xlu0 %v192, 127
      %v213 = vpop.permute.xlu0 %212
      %214 = vrot.lane.b32.xlu0 %v193, 127
      %v215 = vpop.permute.xlu0 %214
      %216 = vrot.lane.b32.xlu0 %v194, 127
      %v217 = vpop.permute.xlu0 %216
      %218 = vrot.lane.b32.xlu0 %v195, 127
      %v219 = vpop.permute.xlu0 %218
      %v220 = vrot.slane %v205, 4
      %v221 = vrot.slane %v207, 4
      %v222 = vrot.slane %v209, 4
      %v223 = vrot.slane %v211, 4
      %v224 = vrot.slane %v213, 4
      %v225 = vrot.slane %v215, 4
      %v226 = vrot.slane %v217, 4
      %v227 = vrot.slane %v219, 4
      %vm228 = vcmask 1043456
      %v229 = vsel %vm228, %v220, %v221
      %vm230 = vcmask 1039360
      %v231 = vsel %vm230, %v205, %v229
      %v232 = vsel %vm230, %v207, %v221
      %v233 = vsel %vm228, %v222, %v223
      %v234 = vsel %vm230, %v209, %v233
      %v235 = vsel %vm230, %v211, %v223
      %v236 = vsel %vm228, %v224, %v225
      %v237 = vsel %vm230, %v213, %v236
      %v238 = vsel %vm230, %v215, %v225
      %v239 = vsel %vm228, %v226, %v227
      %v240 = vsel %vm230, %v217, %v239
      %v241 = vsel %vm230, %v219, %v227
      %250 = vst [vmem:[#allocation2 + $0x30] sm:$0xff] %v231
      %251 = vst [vmem:[#allocation2 + $0x38] sm:$0xf] %v232
      %252 = vst [vmem:[#allocation2 + $0x3c] sm:$0xff] %v234
      %253 = vst [vmem:[#allocation2 + $0x44] sm:$0xf] %v235
      %254 = vst [vmem:[#allocation2 + $0x48] sm:$0xff] %v237
      %255 = vst [vmem:[#allocation2 + $0x50] sm:$0xf] %v238
      %256 = vst [vmem:[#allocation2 + $0x54] sm:$0xff] %v240
      %257 = vst [vmem:[#allocation2 + $0x5c] sm:$0xf] %v241
      %v258 = vld [vmem:[%s165] sm:$0xff]
      %v259 = vld [vmem:[%s165 + $0x8] sm:$0xff]
      %v260 = vld [vmem:[%s165 + $0x10] sm:$0xff]
      %v261 = vld [vmem:[%s165 + $0x18] sm:$0xff]
      %v262 = vld [vmem:[%s165 + $0x20] sm:$0xff]
      %v263 = vld [vmem:[%s165 + $0x28] sm:$0xff]
      %v264 = vld [vmem:[%s165 + $0x30] sm:$0xff]
      %v265 = vld [vmem:[%s165 + $0x38] sm:$0xff]
      %274 = vrot.lane.b32.xlu0 %v258, 110
      %v275 = vpop.permute.xlu0 %274
      %276 = vrot.lane.b32.xlu0 %v259, 110
      %v277 = vpop.permute.xlu0 %276
      %278 = vrot.lane.b32.xlu0 %v260, 110
      %v279 = vpop.permute.xlu0 %278
      %280 = vrot.lane.b32.xlu0 %v261, 110
      %v281 = vpop.permute.xlu0 %280
      %282 = vrot.lane.b32.xlu0 %v262, 110
      %v283 = vpop.permute.xlu0 %282
      %284 = vrot.lane.b32.xlu0 %v263, 110
      %v285 = vpop.permute.xlu0 %284
      %286 = vrot.lane.b32.xlu0 %v264, 110
      %v287 = vpop.permute.xlu0 %286
      %288 = vrot.lane.b32.xlu0 %v265, 110
      %v289 = vpop.permute.xlu0 %288
      %v290 = vrot.slane %v275, 4
      %v291 = vrot.slane %v277, 4
      %v292 = vrot.slane %v279, 4
      %v293 = vrot.slane %v281, 4
      %v294 = vrot.slane %v283, 4
      %v295 = vrot.slane %v285, 4
      %v296 = vrot.slane %v287, 4
      %v297 = vrot.slane %v289, 4
      %v298 = vsel %vm228, %v290, %v291
      %vm299 = vcmask 900096
      %v300 = vsel %vm299, %v275, %v298
      %v301 = vsel %vm299, %v277, %v291
      %v302 = vsel %vm228, %v292, %v293
      %v303 = vsel %vm299, %v279, %v302
      %v304 = vsel %vm299, %v281, %v293
      %v305 = vsel %vm228, %v294, %v295
      %v306 = vsel %vm299, %v283, %v305
      %v307 = vsel %vm299, %v285, %v295
      %v308 = vsel %vm228, %v296, %v297
      %v309 = vsel %vm299, %v287, %v308
      %v310 = vsel %vm299, %v289, %v297
      %319 = vst [vmem:[#allocation2 + $0x60] sm:$0xff] %v300
      %320 = vst [vmem:[#allocation2 + $0x68] sm:$0xf] %v301
      %321 = vst [vmem:[#allocation2 + $0x6c] sm:$0xff] %v303
      %322 = vst [vmem:[#allocation2 + $0x74] sm:$0xf] %v304
      %323 = vst [vmem:[#allocation2 + $0x78] sm:$0xff] %v306
      %324 = vst [vmem:[#allocation2 + $0x80] sm:$0xf] %v307
      %325 = vst [vmem:[#allocation2 + $0x84] sm:$0xff] %v309
      %326 = vst [vmem:[#allocation2 + $0x8c] sm:$0xf] %v310
      %v327 = vld [vmem:[%s165] sm:$0xff]
      %v328 = vld [vmem:[%s165 + $0x8] sm:$0xff]
      %v329 = vld [vmem:[%s165 + $0x10] sm:$0xff]
      %v330 = vld [vmem:[%s165 + $0x18] sm:$0xff]
      %v331 = vld [vmem:[%s165 + $0x20] sm:$0xff]
      %v332 = vld [vmem:[%s165 + $0x28] sm:$0xff]
      %v333 = vld [vmem:[%s165 + $0x30] sm:$0xff]
      %v334 = vld [vmem:[%s165 + $0x38] sm:$0xff]
      %343 = vrot.lane.b32.xlu0 %v327, 109
      %v344 = vpop.permute.xlu0 %343
      %345 = vrot.lane.b32.xlu0 %v328, 109
      %v346 = vpop.permute.xlu0 %345
      %347 = vrot.lane.b32.xlu0 %v329, 109
      %v348 = vpop.permute.xlu0 %347
      %349 = vrot.lane.b32.xlu0 %v330, 109
      %v350 = vpop.permute.xlu0 %349
      %351 = vrot.lane.b32.xlu0 %v331, 109
      %v352 = vpop.permute.xlu0 %351
      %353 = vrot.lane.b32.xlu0 %v332, 109
      %v354 = vpop.permute.xlu0 %353
      %355 = vrot.lane.b32.xlu0 %v333, 109
      %v356 = vpop.permute.xlu0 %355
      %357 = vrot.lane.b32.xlu0 %v334, 109
      %v358 = vpop.permute.xlu0 %357
      %v359 = vrot.slane %v344, 4
      %v360 = vrot.slane %v346, 4
      %v361 = vrot.slane %v348, 4
      %v362 = vrot.slane %v350, 4
      %v363 = vrot.slane %v352, 4
      %v364 = vrot.slane %v354, 4
      %v365 = vrot.slane %v356, 4
      %v366 = vrot.slane %v358, 4
      %v367 = vsel %vm228, %v359, %v360
      %vm368 = vcmask 891904
      %v369 = vsel %vm368, %v344, %v367
      %v370 = vsel %vm368, %v346, %v360
      %v371 = vsel %vm228, %v361, %v362
      %v372 = vsel %vm368, %v348, %v371
      %v373 = vsel %vm368, %v350, %v362
      %v374 = vsel %vm228, %v363, %v364
      %v375 = vsel %vm368, %v352, %v374
      %v376 = vsel %vm368, %v354, %v364
      %v377 = vsel %vm228, %v365, %v366
      %v378 = vsel %vm368, %v356, %v377
      %v379 = vsel %vm368, %v358, %v366
      %388 = vst [vmem:[#allocation2 + $0x90] sm:$0xff] %v369
      %389 = vst [vmem:[#allocation2 + $0x98] sm:$0xf] %v370
      %390 = vst [vmem:[#allocation2 + $0x9c] sm:$0xff] %v372
      %391 = vst [vmem:[#allocation2 + $0xa4] sm:$0xf] %v373
      %392 = vst [vmem:[#allocation2 + $0xa8] sm:$0xff] %v375
      %393 = vst [vmem:[#allocation2 + $0xb0] sm:$0xf] %v376
      %394 = vst [vmem:[#allocation2 + $0xb4] sm:$0xff] %v378
      %395 = vst [vmem:[#allocation2 + $0xbc] sm:$0xf] %v379
      %v396 = vld [vmem:[%s1] sm:$0xf]
      %v397 = vld [vmem:[%s1 + $0x4] sm:$0xf]
      %v398 = vld [vmem:[%s1 + $0x8] sm:$0xf]
      %v399 = vld [vmem:[%s1 + $0xc] sm:$0xf]
      %v400 = vld [vmem:[#allocation2] sm:$0xff]
      %v401 = vld [vmem:[#allocation2 + $0x8] sm:$0xf]
      %v402 = vld [vmem:[#allocation2 + $0xc] sm:$0xff]
      %v403 = vld [vmem:[#allocation2 + $0x14] sm:$0xf]
      %v404 = vld [vmem:[#allocation2 + $0x18] sm:$0xff]
      %v405 = vld [vmem:[#allocation2 + $0x20] sm:$0xf]
      %v406 = vld [vmem:[#allocation2 + $0x24] sm:$0xff]
      %v407 = vld [vmem:[#allocation2 + $0x2c] sm:$0xf]
      %v408 = vld [vmem:[#allocation2 + $0x30] sm:$0xff]
      %v409 = vld [vmem:[#allocation2 + $0x38] sm:$0xf]
      %v410 = vld [vmem:[#allocation2 + $0x3c] sm:$0xff]
      %v411 = vld [vmem:[#allocation2 + $0x44] sm:$0xf]
      %v412 = vld [vmem:[#allocation2 + $0x48] sm:$0xff]
      %v413 = vld [vmem:[#allocation2 + $0x50] sm:$0xf]
      %v414 = vld [vmem:[#allocation2 + $0x54] sm:$0xff]
      %v415 = vld [vmem:[#allocation2 + $0x5c] sm:$0xf]
      %v416 = vld [vmem:[#allocation2 + $0x60] sm:$0xff]
      %v417 = vld [vmem:[#allocation2 + $0x68] sm:$0xf]
      %v418 = vld [vmem:[#allocation2 + $0x6c] sm:$0xff]
      %v419 = vld [vmem:[#allocation2 + $0x74] sm:$0xf]
      %v420 = vld [vmem:[#allocation2 + $0x78] sm:$0xff]
      %v421 = vld [vmem:[#allocation2 + $0x80] sm:$0xf]
      %v422 = vld [vmem:[#allocation2 + $0x84] sm:$0xff]
      %v423 = vld [vmem:[#allocation2 + $0x8c] sm:$0xf]
      %v424 = vld [vmem:[#allocation2 + $0x90] sm:$0xff]
      %v425 = vld [vmem:[#allocation2 + $0x98] sm:$0xf]
      %v426 = vld [vmem:[#allocation2 + $0x9c] sm:$0xff]
      %v427 = vld [vmem:[#allocation2 + $0xa4] sm:$0xf]
      %v428 = vld [vmem:[#allocation2 + $0xa8] sm:$0xff]
      %v429 = vld [vmem:[#allocation2 + $0xb0] sm:$0xf]
      %v430 = vld [vmem:[#allocation2 + $0xb4] sm:$0xff]
      %v431 = vld [vmem:[#allocation2 + $0xbc] sm:$0xf]
      %v432 = vld [vmem:[%s2] sm:$0xff]
      %v433 = vld [vmem:[%s2 + $0x8] sm:$0xff]
      %v434 = vld [vmem:[%s2 + $0x10] sm:$0xff]
      %v435 = vld [vmem:[%s2 + $0x18] sm:$0xff]
      %437 = vset.pattern.permute.xlu0 0
      %438 = vperm.xlu0 %437, %v432
      %v439 = vpop.permute.xlu0 %438
      %442 = vset.pattern.permute.xlu0 0
      %443 = vperm.xlu0 %442, %v433
      %v444 = vpop.permute.xlu0 %443
      %447 = vset.pattern.permute.xlu0 0
      %448 = vperm.xlu0 %447, %v434
      %v449 = vpop.permute.xlu0 %448
      %452 = vset.pattern.permute.xlu0 0
      %453 = vperm.xlu0 %452, %v435
      %v454 = vpop.permute.xlu0 %453
      %v460 = vunpack.c.l.b16 %v396
      %v461 = vunpack.c.l.b16 %v397
      %v462 = vunpack.c.l.b16 %v398
      %v463 = vunpack.c.l.b16 %v399
      %v464 = vpack.c.b16 %v461, %v460
      %v465 = vpack.c.b16 %v463, %v462
      %v500 = vunpack.c.l.b16 %v400
      %v501 = vunpack.c.h.b16 %v400
      %v502 = vunpack.c.l.b16 %v401
      %v503 = vunpack.c.l.b16 %v402
      %v504 = vunpack.c.h.b16 %v402
      %v505 = vunpack.c.l.b16 %v403
      %v506 = vunpack.c.l.b16 %v404
      %v507 = vunpack.c.h.b16 %v404
      %v508 = vunpack.c.l.b16 %v405
      %v509 = vunpack.c.l.b16 %v406
      %v510 = vunpack.c.h.b16 %v406
      %v511 = vunpack.c.l.b16 %v407
      %v512 = vunpack.c.l.b16 %v408
      %v513 = vunpack.c.h.b16 %v408
      %v514 = vunpack.c.l.b16 %v409
      %v515 = vunpack.c.l.b16 %v410
      %v516 = vunpack.c.h.b16 %v410
      %v517 = vunpack.c.l.b16 %v411
      %v518 = vunpack.c.l.b16 %v412
      %v519 = vunpack.c.h.b16 %v412
      %v520 = vunpack.c.l.b16 %v413
      %v521 = vunpack.c.l.b16 %v414
      %v522 = vunpack.c.h.b16 %v414
      %v523 = vunpack.c.l.b16 %v415
      %v524 = vunpack.c.l.b16 %v416
      %v525 = vunpack.c.h.b16 %v416
      %v526 = vunpack.c.l.b16 %v417
      %v527 = vunpack.c.l.b16 %v418
      %v528 = vunpack.c.h.b16 %v418
      %v529 = vunpack.c.l.b16 %v419
      %v530 = vunpack.c.l.b16 %v420
      %v531 = vunpack.c.h.b16 %v420
      %v532 = vunpack.c.l.b16 %v421
      %v533 = vunpack.c.l.b16 %v422
      %v534 = vunpack.c.h.b16 %v422
      %v535 = vunpack.c.l.b16 %v423
      %v536 = vunpack.c.l.b16 %v424
      %v537 = vunpack.c.h.b16 %v424
      %v538 = vunpack.c.l.b16 %v425
      %v539 = vunpack.c.l.b16 %v426
      %v540 = vunpack.c.h.b16 %v426
      %v541 = vunpack.c.l.b16 %v427
      %v542 = vunpack.c.l.b16 %v428
      %v543 = vunpack.c.h.b16 %v428
      %v544 = vunpack.c.l.b16 %v429
      %v545 = vunpack.c.l.b16 %v430
      %v546 = vunpack.c.h.b16 %v430
      %v547 = vunpack.c.l.b16 %v431
      %v548 = vpack.c.b16 %v503, %v500
      %v549 = vpack.c.b16 %v504, %v501
      %v550 = vpack.c.b16 %v505, %v502
      %v551 = vpack.c.b16 %v509, %v506
      %v552 = vpack.c.b16 %v510, %v507
      %v553 = vpack.c.b16 %v511, %v508
      %v554 = vpack.c.b16 %v515, %v512
      %v555 = vpack.c.b16 %v516, %v513
      %v556 = vpack.c.b16 %v517, %v514
      %v557 = vpack.c.b16 %v521, %v518
      %v558 = vpack.c.b16 %v522, %v519
      %v559 = vpack.c.b16 %v523, %v520
      %v560 = vpack.c.b16 %v527, %v524
      %v561 = vpack.c.b16 %v528, %v525
      %v562 = vpack.c.b16 %v529, %v526
      %v563 = vpack.c.b16 %v533, %v530
      %v564 = vpack.c.b16 %v534, %v531
      %v565 = vpack.c.b16 %v535, %v532
      %v566 = vpack.c.b16 %v539, %v536
      %v567 = vpack.c.b16 %v540, %v537
      %v568 = vpack.c.b16 %v541, %v538
      %v569 = vpack.c.b16 %v545, %v542
      %v570 = vpack.c.b16 %v546, %v543
      %v571 = vpack.c.b16 %v547, %v544
      %596 = vmatprep.subr.bf16.mxu0 %v570
      %597 = vmatpush1.bf16.msra.mxu0 %v569
      %598 = vmatprep.subr.bf16.mxu0 %v567
      %599 = vmatpush1.bf16.msra.mxu0 %v566
      %600 = vmatprep.subr.bf16.mxu0 %v564
      %601 = vmatpush1.bf16.msra.mxu0 %v563
      %602 = vmatprep.subr.bf16.mxu0 %v561
      %603 = vmatpush1.bf16.msra.mxu0 %v560
      %604 = vmatprep.subr.bf16.mxu0 %v558
      %605 = vmatpush1.bf16.msra.mxu0 %v557
      %606 = vmatprep.subr.bf16.mxu0 %v555
      %607 = vmatpush1.bf16.msra.mxu0 %v554
      %608 = vmatprep.subr.bf16.mxu0 %v552
      %609 = vmatpush1.bf16.msra.mxu0 %v551
      %610 = vmatprep.subr.bf16.mxu0 %v549
      %611 = vmatpush1.bf16.msra.mxu0 %v548
      %612 = vmatprep.subr.bf16.mxu0 0
      %613 = vmatpush2.bf16.msra.mxu0 0
      %614 = vmatprep.subr.bf16.mxu0 0
      %615 = vmatpush2.bf16.msra.mxu0 0
      %616 = vmatprep.subr.bf16.mxu0 0
      %617 = vmatpush2.bf16.msra.mxu0 0
      %618 = vmatprep.subr.bf16.mxu0 0
      %619 = vmatpush2.bf16.msra.mxu0 0
      %620 = vmatprep.subr.bf16.mxu0 0
      %621 = vmatpush2.bf16.msra.mxu0 0
      %622 = vmatprep.subr.bf16.mxu0 0
      %623 = vmatpush2.bf16.msra.mxu0 0
      %624 = vmatprep.subr.bf16.mxu0 0
      %625 = vmatpush2.bf16.msra.mxu0 0
      %626 = vmatprep.subr.bf16.mxu0 0
      %627 = vmatpush2.bf16.msra.mxu0 0
      %628 = vmatprep.mubr.bf16.mxu0 0
      %629 = vmatmul.mubr.bf16.gmra.mxu0 %v464
      %v630 = vpop.f32.mrf.mxu0
      %v631 = vadd.f32 %v439, %v630
      %v632 = vpop.f32.mrf.mxu0
      %v633 = vadd.f32 %v439, %v632
      %v634 = vpop.f32.mrf.mxu0
      %v635 = vadd.f32 %v444, %v634
      %v636 = vpop.f32.mrf.mxu0
      %v637 = vadd.f32 %v444, %v636
      %638 = vmatprep.mubr.bf16.mxu0 0
      %639 = vmatmul.mubr.bf16.gmra.mxu0 %v465
      %v640 = vpop.f32.mrf.mxu0
      %v641 = vadd.f32 %v449, %v640
      %v642 = vpop.f32.mrf.mxu0
      %v643 = vadd.f32 %v449, %v642
      %v644 = vpop.f32.mrf.mxu0
      %v645 = vadd.f32 %v454, %v644
      %v646 = vpop.f32.mrf.mxu0
      %v647 = vadd.f32 %v454, %v646
      %648 = vdwg.mxu0
      %649 = vmatprep.subr.bf16.mxu0 0
      %650 = vmatpush1.bf16.msra.mxu0 %v571
      %651 = vmatprep.subr.bf16.mxu0 0
      %652 = vmatpush1.bf16.msra.mxu0 %v568
      %653 = vmatprep.subr.bf16.mxu0 0
      %654 = vmatpush1.bf16.msra.mxu0 %v565
      %655 = vmatprep.subr.bf16.mxu0 0
      %656 = vmatpush1.bf16.msra.mxu0 %v562
      %657 = vmatprep.subr.bf16.mxu0 0
      %658 = vmatpush1.bf16.msra.mxu0 %v559
      %659 = vmatprep.subr.bf16.mxu0 0
      %660 = vmatpush1.bf16.msra.mxu0 %v556
      %661 = vmatprep.subr.bf16.mxu0 0
      %662 = vmatpush1.bf16.msra.mxu0 %v553
      %663 = vmatprep.subr.bf16.mxu0 0
      %664 = vmatpush1.bf16.msra.mxu0 %v550
      %665 = vmatprep.subr.bf16.mxu0 0
      %666 = vmatpush2.bf16.msra.mxu0 0
      %667 = vmatprep.subr.bf16.mxu0 0
      %668 = vmatpush2.bf16.msra.mxu0 0
      %669 = vmatprep.subr.bf16.mxu0 0
      %670 = vmatpush2.bf16.msra.mxu0 0
      %671 = vmatprep.subr.bf16.mxu0 0
      %672 = vmatpush2.bf16.msra.mxu0 0
      %673 = vmatprep.subr.bf16.mxu0 0
      %674 = vmatpush2.bf16.msra.mxu0 0
      %675 = vmatprep.subr.bf16.mxu0 0
      %676 = vmatpush2.bf16.msra.mxu0 0
      %677 = vmatprep.subr.bf16.mxu0 0
      %678 = vmatpush2.bf16.msra.mxu0 0
      %679 = vmatprep.subr.bf16.mxu0 0
      %680 = vmatpush2.bf16.msra.mxu0 0
      %681 = vmatprep.mubr.bf16.mxu0 0
      %682 = vmatmul.mubr.bf16.gmra.mxu0 %v464
      %v683 = vpop.f32.mrf.mxu0
      %v684 = vadd.f32 %v439, %v683
      %v685 = vpop.f32.mrf.mxu0
      %v686 = vpop.f32.mrf.mxu0
      %v687 = vadd.f32 %v444, %v686
      %v688 = vpop.f32.mrf.mxu0
      %689 = vmatprep.mubr.bf16.mxu0 0
      %690 = vmatmul.mubr.bf16.gmra.mxu0 %v465
      %v691 = vpop.f32.mrf.mxu0
      %v692 = vadd.f32 %v449, %v691
      %v693 = vpop.f32.mrf.mxu0
      %v694 = vpop.f32.mrf.mxu0
      %v695 = vadd.f32 %v454, %v694
      %v696 = vpop.f32.mrf.mxu0
      %697 = vdwg.mxu0
      %698 = vst [vmem:[%s170] sm:$0xff] %v631
      %699 = vst [vmem:[%s170 + $0x8] sm:$0xff] %v633
      %700 = vst [vmem:[%s170 + $0x10] sm:$0xff] %v684
      %701 = vst [vmem:[%s170 + $0x18] sm:$0xff] %v635
      %702 = vst [vmem:[%s170 + $0x20] sm:$0xff] %v637
      %703 = vst [vmem:[%s170 + $0x28] sm:$0xff] %v687
      %704 = vst [vmem:[%s170 + $0x30] sm:$0xff] %v641
      %705 = vst [vmem:[%s170 + $0x38] sm:$0xff] %v643
      %706 = vst [vmem:[%s170 + $0x40] sm:$0xff] %v692
      %707 = vst [vmem:[%s170 + $0x48] sm:$0xff] %v645
      %708 = vst [vmem:[%s170 + $0x50] sm:$0xff] %v647
      %709 = vst [vmem:[%s170 + $0x58] sm:$0xff] %v695
      %p710 = scmp.lt.s32.totalorder %s14, 1
      %s711 = scalar_select %p710, %s14, 1
      %s712 = smul.addr %s711, 12
      %s713 = smul.addr %s712, 8
      %s714 = scalar_lea.vmem %s3, %s713
      // Predicated region
      $region33: #{residual_forward.2} parent=31 // pred_check
        %p715 = pneg %p100
      $region34: #{residual_forward.2} parent=31 // pred_check_branch
        %717 = sbr.rel (%p715) target = $region36
      $region35: #{residual_forward.2} parent=31 // pred_region
        _
      $region36: #{residual_forward.2} parent=31 // pred_fallthru
        _
    $region32: #{residual_forward.2} parent=5 // pred_fallthru
      _
    %p718 = scmp.le.s32.totalorder 2, %s9
    // Predicated region
    $region37: #{residual_forward.2} parent=5 // pred_check
      %p719 = pneg %p718
    $region38: #{residual_forward.2} parent=5 // pred_check_branch
      %721 = sbr.rel (%p719) target = $region40
    $region39: #{residual_forward.2} parent=5 // pred_region
      %s722 = ssub.s32 %s9, 2
      // Predicated region
      $region41: #{residual_forward.2} parent=39 // pred_check
        %p723 = pneg %p106
      $region42: #{residual_forward.2} parent=39 // pred_check_branch
        %725 = sbr.rel (%p723) target = $region44
      $region43: #{residual_forward.2} parent=39 // pred_region
        %p726 = scmp.lt.s32.totalorder %s15, 1
        %s727 = scalar_select %p726, %s15, 1
        %s728 = smul.addr %s727, 12
        %s729 = smul.addr %s728, 8
        %s730 = scalar_lea.vmem %s3, %s729
      $region44: #{residual_forward.2} parent=39 // pred_fallthru
        _
    $region40: #{residual_forward.2} parent=5 // pred_fallthru
      _
  $region6: #{residual_forward.2} parent=0 // loop_footer
    %s13 = sadd.s32 1, %s9
  $region7: #{residual_forward.2} parent=0 // loop_footer_branch
    %8 = sbr.rel target = $region3
  $region8: #{residual_forward.2} parent=0 // loop_exit
    _

// kernel: residual_forward.3
$region0: #{residual_forward.3}
  #allocation0 [shape = 'u32[]', space=smem, size = 0x4, offset = 0x4, fixed_abs, tag = 'smem constant byte address 0x4 - core index']
  #allocation1 [shape = 'u32[144,128]{1,0:T(1,128)}', space=vmem, size = 0x12000, scoped, tag = 'internal scratch']
  #allocation2 [shape = 'bf16[512,384]{1,0:T(8,128)(2,1)}', space=vmem, size = 0x60000, scoped, tag = 'scratch operand']
  %s0 = inlined_call_operand.vmem [shape: bf16[2,32,460], index: 0, kind: input, shape index: {}]
  %s1 = inlined_call_operand.vmem [shape: bf16[32,512], index: 1, kind: input, shape index: {}]
  %s2 = inlined_call_operand.vmem [shape: f32[32,1], index: 2, kind: input, shape index: {}]
  %s3 = inlined_call_operand.vmem [shape: f32[2,32,400], index: 3, kind: input, shape index: {}]
  %s4 = inlined_call_operand.vmem [shape: f32[2,32,384], index: 4, kind: output, shape index: {}]
  %s5 = sld [smem:[#allocation0]]
  $region49: #{residual_forward.3} parent=0
    _
  %s7 = ssub.s32 1, %s5
  %s8 = scalar_select 0, %s7, %s5
  loop: start=0, step=1, limit=4
  $region2: #{residual_forward.3} parent=0 // loop_pre_header
    _
  $region3: #{residual_forward.3} parent=0 // loop_header
    %s10 = sphi 0, %s14
    %p11 = scmp.ge.s32.totalorder %s10, 4
    %s20 = sphi 0, %s22
    %s23 = sphi 0, %s20
    %s24 = sphi 0, %s23
    %s40 = sphi 0, %s24
    %s44 = sphi 0, %s44
    %s46 = sphi 0, %s44
    %s47 = sphi 0, %s46
    %s61 = sphi 0, %s47
    %s65 = sphi 0, %s65
    %s67 = sphi 0, %s65
    %s68 = sphi 0, %s67
    %s82 = sphi 0, %s68
    %s88 = sphi 0, %s90
    %s91 = sphi 0, %s88
    %s92 = sphi 0, %s91
    %s108 = sphi 0, %s92
    %s114 = sphi 0, %s116
    %s117 = sphi 0, %s114
    %s118 = sphi 0, %s117
    %s134 = sphi 0, %s118
  $region4: #{residual_forward.3} parent=0 // loop_header_branch
    %13 = sbr.rel (%p11) target = $region8
  $region5: #{residual_forward.3} parent=0 // loop_body
    %s15 = ssub.s32 %s10, 1
    %s16 = ssub.s32 %s10, 2
    %s17 = sadd.s32 %s10, 1
    %s18 = ssub.s32 %s10, %s17
    %p19 = scmp.eq.s32.totalorder %s18, 0
    %s21 = sadd.s32 %s20, 1
    %s22 = scalar_select %p19, %s20, %s21
    %p25 = pneg %p19
    %p26 = scmp.eq.s32.totalorder %s10, 1
    %p27 = por %p25, %p26
    %p28 = scmp.ne.s32.totalorder %s20, %s23
    %p29 = scmp.eq.s32.totalorder %s10, 0
    %p30 = por %p28, %p29
    %p31 = scmp.ne.s32.totalorder %s20, %s23
    %p32 = scmp.eq.s32.totalorder %s15, 1
    %p33 = por %p31, %p32
    %p34 = scmp.ne.s32.totalorder %s23, %s24
    %p35 = scmp.eq.s32.totalorder %s15, 0
    %p36 = por %p34, %p35
    %p37 = scmp.ne.s32.totalorder %s23, %s24
    %p38 = scmp.eq.s32.totalorder %s16, 1
    %p39 = por %p37, %p38
    %p41 = scmp.ne.s32.totalorder %s24, %s40
    %p42 = scmp.eq.s32.totalorder %s16, 0
    %p43 = por %p41, %p42
    %s45 = sadd.s32 %s44, 1
    %p48 = scmp.eq.s32.totalorder %s10, 1
    %p49 = scmp.ne.s32.totalorder %s44, %s46
    %p50 = scmp.eq.s32.totalorder %s10, 0
    %p51 = por %p49, %p50
    %p52 = scmp.ne.s32.totalorder %s44, %s46
    %p53 = scmp.eq.s32.totalorder %s15, 1
    %p54 = por %p52, %p53
    %p55 = scmp.ne.s32.totalorder %s46, %s47
    %p56 = scmp.eq.s32.totalorder %s15, 0
    %p57 = por %p55, %p56
    %p58 = scmp.ne.s32.totalorder %s46, %s47
    %p59 = scmp.eq.s32.totalorder %s16, 1
    %p60 = por %p58, %p59
    %p62 = scmp.ne.s32.totalorder %s47, %s61
    %p63 = scmp.eq.s32.totalorder %s16, 0
    %p64 = por %p62, %p63
    %s66 = sadd.s32 %s65, 1
    %p69 = scmp.eq.s32.totalorder %s10, 1
    %p70 = scmp.ne.s32.totalorder %s65, %s67
    %p71 = scmp.eq.s32.totalorder %s10, 0
    %p72 = por %p70, %p71
    %p73 = scmp.ne.s32.totalorder %s65, %s67
    %p74 = scmp.eq.s32.totalorder %s15, 1
    %p75 = por %p73, %p74
    %p76 = scmp.ne.s32.totalorder %s67, %s68
    %p77 = scmp.eq.s32.totalorder %s15, 0
    %p78 = por %p76, %p77
    %p79 = scmp.ne.s32.totalorder %s67, %s68
    %p80 = scmp.eq.s32.totalorder %s16, 1
    %p81 = por %p79, %p80
    %p83 = scmp.ne.s32.totalorder %s68, %s82
    %p84 = scmp.eq.s32.totalorder %s16, 0
    %p85 = por %p83, %p84
    %s86 = ssub.s32 %s10, %s17
    %p87 = scmp.eq.s32.totalorder %s86, 0
    %s89 = sadd.s32 %s88, 1
    %s90 = scalar_select %p87, %s88, %s89
    %p93 = pneg %p87
    %p94 = scmp.eq.s32.totalorder %s10, 1
    %p95 = por %p93, %p94
    %p96 = scmp.ne.s32.totalorder %s88, %s91
    %p97 = scmp.eq.s32.totalorder %s10, 0
    %p98 = por %p96, %p97
    %p99 = scmp.ne.s32.totalorder %s88, %s91
    %p100 = scmp.eq.s32.totalorder %s15, 1
    %p101 = por %p99, %p100
    %p102 = scmp.ne.s32.totalorder %s91, %s92
    %p103 = scmp.eq.s32.totalorder %s15, 0
    %p104 = por %p102, %p103
    %p105 = scmp.ne.s32.totalorder %s91, %s92
    %p106 = scmp.eq.s32.totalorder %s16, 1
    %p107 = por %p105, %p106
    %p109 = scmp.ne.s32.totalorder %s92, %s108
    %p110 = scmp.eq.s32.totalorder %s16, 0
    %p111 = por %p109, %p110
    %s112 = ssub.s32 %s10, %s17
    %p113 = scmp.eq.s32.totalorder %s112, 0
    %s115 = sadd.s32 %s114, 1
    %s116 = scalar_select %p113, %s114, %s115
    %p119 = pneg %p113
    %p120 = scmp.eq.s32.totalorder %s10, 1
    %p121 = por %p119, %p120
    %p122 = scmp.ne.s32.totalorder %s114, %s117
    %p123 = scmp.eq.s32.totalorder %s10, 0
    %p124 = por %p122, %p123
    %p125 = scmp.ne.s32.totalorder %s114, %s117
    %p126 = scmp.eq.s32.totalorder %s15, 1
    %p127 = por %p125, %p126
    %p128 = scmp.ne.s32.totalorder %s117, %s118
    %p129 = scmp.eq.s32.totalorder %s15, 0
    %p130 = por %p128, %p129
    %p131 = scmp.ne.s32.totalorder %s117, %s118
    %p132 = scmp.eq.s32.totalorder %s16, 1
    %p133 = por %p131, %p132
    %p135 = scmp.ne.s32.totalorder %s118, %s134
    %p136 = scmp.eq.s32.totalorder %s16, 0
    %p137 = por %p135, %p136
    %p138 = scmp.le.s32.totalorder 1, %s10
    %p139 = scmp.lt.s32.totalorder %s10, 3
    %p140 = pnand %p138, %p139
    %p141 = pneg %p140
    // Predicated region
    $region9: #{residual_forward.3} parent=5 // pred_check
      _
    $region10: #{residual_forward.3} parent=5 // pred_check_branch
      %143 = sbr.rel (%p140) target = $region12
    $region11: #{residual_forward.3} parent=5 // pred_region
      %s144 = ssub.s32 %s10, 1
      // Predicated region
      $region13: #{residual_forward.3} parent=11 // pred_check
        %p145 = pneg %p57
      $region14: #{residual_forward.3} parent=11 // pred_check_branch
        %147 = sbr.rel (%p145) target = $region16
      $region15: #{residual_forward.3} parent=11 // pred_region
        _
      $region16: #{residual_forward.3} parent=11 // pred_fallthru
        _
      // Predicated region
      $region17: #{residual_forward.3} parent=11 // pred_check
        %p148 = pneg %p78
      $region18: #{residual_forward.3} parent=11 // pred_check_branch
        %150 = sbr.rel (%p148) target = $region20
      $region19: #{residual_forward.3} parent=11 // pred_region
        _
      $region20: #{residual_forward.3} parent=11 // pred_fallthru
        _
    $region12: #{residual_forward.3} parent=5 // pred_fallthru
      _
    %p151 = scmp.lt.s32.totalorder %s10, 2
    // Predicated region
    $region21: #{residual_forward.3} parent=5 // pred_check
      %p152 = pneg %p151
    $region22: #{residual_forward.3} parent=5 // pred_check_branch
      %154 = sbr.rel (%p152) target = $region24
    $region23: #{residual_forward.3} parent=5 // pred_region
      // Predicated region
      $region25: #{residual_forward.3} parent=23 // pred_check
        %p155 = pneg %p30
      $region26: #{residual_forward.3} parent=23 // pred_check_branch
        %157 = sbr.rel (%p155) target = $region28
      $region27: #{residual_forward.3} parent=23 // pred_region
        %p158 = scmp.lt.s32.totalorder %s10, 1
        %s159 = scalar_select %p158, %s10, 1
        %s160 = smul.addr %s159, 16
        %s161 = smul.addr %s160, 4
        %s162 = scalar_lea.vmem %s0, %s161
      $region28: #{residual_forward.3} parent=23 // pred_fallthru
        _
      // Predicated region
      $region29: #{residual_forward.3} parent=23 // pred_check
        %p163 = pneg %p98
      $region30: #{residual_forward.3} parent=23 // pred_check_branch
        %165 = sbr.rel (%p163) target = $region32
      $region31: #{residual_forward.3} parent=23 // pred_region
        %p166 = scmp.lt.s32.totalorder %s10, 1
        %s167 = scalar_select %p166, %s10, 1
        %s168 = smul.addr %s167, 16
        %s169 = smul.addr %s168, 8
        %s170 = scalar_lea.vmem %s3, %s169
      $region32: #{residual_forward.3} parent=23 // pred_fallthru
        _
    $region24: #{residual_forward.3} parent=5 // pred_fallthru
      _
    %p171 = scmp.le.s32.totalorder 1, %s10
    %p172 = scmp.lt.s32.totalorder %s10, 3
    %p173 = pnand %p171, %p172
    %p174 = pneg %p173
    // Predicated region
    $region33: #{residual_forward.3} parent=5 // pred_check
      _
    $region34: #{residual_forward.3} parent=5 // pred_check_branch
      %176 = sbr.rel (%p173) target = $region36
    $region35: #{residual_forward.3} parent=5 // pred_region
      %s177 = ssub.s32 %s10, 1
      %p178 = scmp.lt.s32.totalorder %s15, 1
      %s179 = scalar_select %p178, %s15, 1
      %s180 = smul.addr %s179, 16
      %s181 = smul.addr %s180, 4
      %s182 = scalar_lea.vmem %s0, %s181
      %p183 = pneg %p36
      %p184 = pneg %p33
      %p185 = pneg %p57
      %p186 = pneg %p54
      %p187 = pneg %p78
      %p188 = pneg %p75
      %p189 = scmp.lt.s32.totalorder %s15, 1
      %s190 = scalar_select %p189, %s15, 1
      %s191 = smul.addr %s190, 16
      %s192 = smul.addr %s191, 8
      %s193 = scalar_lea.vmem %s3, %s192
      %p194 = pneg %p104
      %p195 = pneg %p101
      %p196 = pneg %p130
      %p197 = pneg %p127
      %p198 = scmp.lt.s32.totalorder %s15, 1
      %s199 = scalar_select %p198, %s15, 1
      %s200 = smul.addr %s199, 12
      %s201 = smul.addr %s200, 8
      %s202 = scalar_lea.vmem %s4, %s201
      %p203 = scmp.lt.s32.totalorder %s15, 1
      %s204 = scalar_select %p203, %s15, 1
      %s205 = smul.addr %s204, 16
      %s206 = smul.addr %s205, 4
      %s207 = scalar_lea.vmem %s0, %s206
      %p208 = scmp.lt.s32.totalorder %s15, 1
      %s209 = scalar_select %p208, %s15, 1
      %s210 = smul.addr %s209, 16
      %s211 = smul.addr %s210, 8
      %s212 = scalar_lea.vmem %s3, %s211
      %p213 = scmp.lt.s32.totalorder %s15, 1
      %s214 = scalar_select %p213, %s15, 1
      %s215 = smul.addr %s214, 12
      %s216 = smul.addr %s215, 8
      %s217 = scalar_lea.vmem %s4, %s216
      %v219 = vld [vmem:[%s207] sm:$0xff]
      %v220 = vld [vmem:[%s207 + $0x8] sm:$0xf]
      %v221 = vld [vmem:[%s207 + $0x10] sm:$0xff]
      %v222 = vld [vmem:[%s207 + $0x18] sm:$0xf]
      %v223 = vld [vmem:[%s207 + $0x20] sm:$0xff]
      %v224 = vld [vmem:[%s207 + $0x28] sm:$0xf]
      %v225 = vld [vmem:[%s207 + $0x30] sm:$0xff]
      %v226 = vld [vmem:[%s207 + $0x38] sm:$0xf]
      %227 = vst [vmem:[#allocation2] sm:$0xff] %v219
      %228 = vst [vmem:[#allocation2 + $0x8] sm:$0xf] %v220
      %229 = vst [vmem:[#allocation2 + $0xc] sm:$0xff] %v221
      %230 = vst [vmem:[#allocation2 + $0x14] sm:$0xf] %v222
      %231 = vst [vmem:[#allocation2 + $0x18] sm:$0xff] %v223
      %232 = vst [vmem:[#allocation2 + $0x20] sm:$0xf] %v224
      %233 = vst [vmem:[#allocation2 + $0x24] sm:$0xff] %v225
      %234 = vst [vmem:[#allocation2 + $0x2c] sm:$0xf] %v226
      %v235 = vld [vmem:[%s207] sm:$0xff]
      %v236 = vld [vmem:[%s207 + $0x8] sm:$0xff]
      %v237 = vld [vmem:[%s207 + $0x10] sm:$0xff]
      %v238 = vld [vmem:[%s207 + $0x18] sm:$0xff]
      %v239 = vld [vmem:[%s207 + $0x20] sm:$0xff]
      %v240 = vld [vmem:[%s207 + $0x28] sm:$0xff]
      %v241 = vld [vmem:[%s207 + $0x30] sm:$0xff]
      %v242 = vld [vmem:[%s207 + $0x38] sm:$0xff]
      %251 = vrot.lane.b32.xlu0 %v235, 127
      %v252 = vpop.permute.xlu0 %251
      %253 = vrot.lane.b32.xlu0 %v236, 127
      %v254 = vpop.permute.xlu0 %253
      %255 = vrot.lane.b32.xlu0 %v237, 127
      %v256 = vpop.permute.xlu0 %255
      %257 = vrot.lane.b32.xlu0 %v238, 127
      %v258 = vpop.permute.xlu0 %257
      %259 = vrot.lane.b32.xlu0 %v239, 127
      %v260 = vpop.permute.xlu0 %259
      %261 = vrot.lane.b32.xlu0 %v240, 127
      %v262 = vpop.permute.xlu0 %261
      %263 = vrot.lane.b32.xlu0 %v241, 127
      %v264 = vpop.permute.xlu0 %263
      %265 = vrot.lane.b32.xlu0 %v242, 127
      %v266 = vpop.permute.xlu0 %265
      %v267 = vrot.slane %v252, 4
      %v268 = vrot.slane %v254, 4
      %v269 = vrot.slane %v256, 4
      %v270 = vrot.slane %v258, 4
      %v271 = vrot.slane %v260, 4
      %v272 = vrot.slane %v262, 4
      %v273 = vrot.slane %v264, 4
      %v274 = vrot.slane %v266, 4
      %vm275 = vcmask 1043456
      %v276 = vsel %vm275, %v267, %v268
      %vm277 = vcmask 1039360
      %v278 = vsel %vm277, %v252, %v276
      %v279 = vsel %vm277, %v254, %v268
      %v280 = vsel %vm275, %v269, %v270
      %v281 = vsel %vm277, %v256, %v280
      %v282 = vsel %vm277, %v258, %v270
      %v283 = vsel %vm275, %v271, %v272
      %v284 = vsel %vm277, %v260, %v283
      %v285 = vsel %vm277, %v262, %v272
      %v286 = vsel %vm275, %v273, %v274
      %v287 = vsel %vm277, %v264, %v286
      %v288 = vsel %vm277, %v266, %v274
      %297 = vst [vmem:[#allocation2 + $0x30] sm:$0xff] %v278
      %298 = vst [vmem:[#allocation2 + $0x38] sm:$0xf] %v279
      %299 = vst [vmem:[#allocation2 + $0x3c] sm:$0xff] %v281
      %300 = vst [vmem:[#allocation2 + $0x44] sm:$0xf] %v282
      %301 = vst [vmem:[#allocation2 + $0x48] sm:$0xff] %v284
      %302 = vst [vmem:[#allocation2 + $0x50] sm:$0xf] %v285
      %303 = vst [vmem:[#allocation2 + $0x54] sm:$0xff] %v287
      %304 = vst [vmem:[#allocation2 + $0x5c] sm:$0xf] %v288
      %v305 = vld [vmem:[%s207] sm:$0xff]
      %v306 = vld [vmem:[%s207 + $0x8] sm:$0xff]
      %v307 = vld [vmem:[%s207 + $0x10] sm:$0xff]
      %v308 = vld [vmem:[%s207 + $0x18] sm:$0xff]
      %v309 = vld [vmem:[%s207 + $0x20] sm:$0xff]
      %v310 = vld [vmem:[%s207 + $0x28] sm:$0xff]
      %v311 = vld [vmem:[%s207 + $0x30] sm:$0xff]
      %v312 = vld [vmem:[%s207 + $0x38] sm:$0xff]
      %321 = vrot.lane.b32.xlu0 %v305, 126
      %v322 = vpop.permute.xlu0 %321
      %323 = vrot.lane.b32.xlu0 %v306, 126
      %v324 = vpop.permute.xlu0 %323
      %325 = vrot.lane.b32.xlu0 %v307, 126
      %v326 = vpop.permute.xlu0 %325
      %327 = vrot.lane.b32.xlu0 %v308, 126
      %v328 = vpop.permute.xlu0 %327
      %329 = vrot.lane.b32.xlu0 %v309, 126
      %v330 = vpop.permute.xlu0 %329
      %331 = vrot.lane.b32.xlu0 %v310, 126
      %v332 = vpop.permute.xlu0 %331
      %333 = vrot.lane.b32.xlu0 %v311, 126
      %v334 = vpop.permute.xlu0 %333
      %335 = vrot.lane.b32.xlu0 %v312, 126
      %v336 = vpop.permute.xlu0 %335
      %v337 = vrot.slane %v322, 4
      %v338 = vrot.slane %v324, 4
      %v339 = vrot.slane %v326, 4
      %v340 = vrot.slane %v328, 4
      %v341 = vrot.slane %v330, 4
      %v342 = vrot.slane %v332, 4
      %v343 = vrot.slane %v334, 4
      %v344 = vrot.slane %v336, 4
      %v345 = vsel %vm275, %v337, %v338
      %vm346 = vcmask 1031168
      %v347 = vsel %vm346, %v322, %v345
      %v348 = vsel %vm346, %v324, %v338
      %v349 = vsel %vm275, %v339, %v340
      %v350 = vsel %vm346, %v326, %v349
      %v351 = vsel %vm346, %v328, %v340
      %v352 = vsel %vm275, %v341, %v342
      %v353 = vsel %vm346, %v330, %v352
      %v354 = vsel %vm346, %v332, %v342
      %v355 = vsel %vm275, %v343, %v344
      %v356 = vsel %vm346, %v334, %v355
      %v357 = vsel %vm346, %v336, %v344
      %366 = vst [vmem:[#allocation2 + $0x60] sm:$0xff] %v347
      %367 = vst [vmem:[#allocation2 + $0x68] sm:$0xf] %v348
      %368 = vst [vmem:[#allocation2 + $0x6c] sm:$0xff] %v350
      %369 = vst [vmem:[#allocation2 + $0x74] sm:$0xf] %v351
      %370 = vst [vmem:[#allocation2 + $0x78] sm:$0xff] %v353
      %371 = vst [vmem:[#allocation2 + $0x80] sm:$0xf] %v354
      %372 = vst [vmem:[#allocation2 + $0x84] sm:$0xff] %v356
      %373 = vst [vmem:[#allocation2 + $0x8c] sm:$0xf] %v357
      %v374 = vld [vmem:[%s207] sm:$0xff]
      %v375 = vld [vmem:[%s207 + $0x8] sm:$0xff]
      %v376 = vld [vmem:[%s207 + $0x10] sm:$0xff]
      %v377 = vld [vmem:[%s207 + $0x18] sm:$0xff]
      %v378 = vld [vmem:[%s207 + $0x20] sm:$0xff]
      %v379 = vld [vmem:[%s207 + $0x28] sm:$0xff]
      %v380 = vld [vmem:[%s207 + $0x30] sm:$0xff]
      %v381 = vld [vmem:[%s207 + $0x38] sm:$0xff]
      %390 = vrot.lane.b32.xlu0 %v374, 125
      %v391 = vpop.permute.xlu0 %390
      %392 = vrot.lane.b32.xlu0 %v375, 125
      %v393 = vpop.permute.xlu0 %392
      %394 = vrot.lane.b32.xlu0 %v376, 125
      %v395 = vpop.permute.xlu0 %394
      %396 = vrot.lane.b32.xlu0 %v377, 125
      %v397 = vpop.permute.xlu0 %396
      %398 = vrot.lane.b32.xlu0 %v378, 125
      %v399 = vpop.permute.xlu0 %398
      %400 = vrot.lane.b32.xlu0 %v379, 125
      %v401 = vpop.permute.xlu0 %400
      %402 = vrot.lane.b32.xlu0 %v380, 125
      %v403 = vpop.permute.xlu0 %402
      %404 = vrot.lane.b32.xlu0 %v381, 125
      %v405 = vpop.permute.xlu0 %404
      %v406 = vrot.slane %v391, 4
      %v407 = vrot.slane %v393, 4
      %v408 = vrot.slane %v395, 4
      %v409 = vrot.slane %v397, 4
      %v410 = vrot.slane %v399, 4
      %v411 = vrot.slane %v401, 4
      %v412 = vrot.slane %v403, 4
      %v413 = vrot.slane %v405, 4
      %v414 = vsel %vm275, %v406, %v407
      %vm415 = vcmask 1022976
      %v416 = vsel %vm415, %v391, %v414
      %v417 = vsel %vm415, %v393, %v407
      %v418 = vsel %vm275, %v408, %v409
      %v419 = vsel %vm415, %v395, %v418
      %v420 = vsel %vm415, %v397, %v409
      %v421 = vsel %vm275, %v410, %v411
      %v422 = vsel %vm415, %v399, %v421
      %v423 = vsel %vm415, %v401, %v411
      %v424 = vsel %vm275, %v412, %v413
      %v425 = vsel %vm415, %v403, %v424
      %v426 = vsel %vm415, %v405, %v413
      %435 = vst [vmem:[#allocation2 + $0x90] sm:$0xff] %v416
      %436 = vst [vmem:[#allocation2 + $0x98] sm:$0xf] %v417
      %437 = vst [vmem:[#allocation2 + $0x9c] sm:$0xff] %v419
      %438 = vst [vmem:[#allocation2 + $0xa4] sm:$0xf] %v420
      %439 = vst [vmem:[#allocation2 + $0xa8] sm:$0xff] %v422
      %440 = vst [vmem:[#allocation2 + $0xb0] sm:$0xf] %v423
      %441 = vst [vmem:[#allocation2 + $0xb4] sm:$0xff] %v425
      %442 = vst [vmem:[#allocation2 + $0xbc] sm:$0xf] %v426
      %v443 = vld [vmem:[%s207] sm:$0xff]
      %v444 = vld [vmem:[%s207 + $0x8] sm:$0xff]
      %v445 = vld [vmem:[%s207 + $0x10] sm:$0xff]
      %v446 = vld [vmem:[%s207 + $0x18] sm:$0xff]
      %v447 = vld [vmem:[%s207 + $0x20] sm:$0xff]
      %v448 = vld [vmem:[%s207 + $0x28] sm:$0xff]
      %v449 = vld [vmem:[%s207 + $0x30] sm:$0xff]
      %v450 = vld [vmem:[%s207 + $0x38] sm:$0xff]
      %459 = vrot.lane.b32.xlu0 %v443, 108
      %v460 = vpop.permute.xlu0 %459
      %461 = vrot.lane.b32.xlu0 %v444, 108
      %v462 = vpop.permute.xlu0 %461
      %463 = vrot.lane.b32.xlu0 %v445, 108
      %v464 = vpop.permute.xlu0 %463
      %465 = vrot.lane.b32.xlu0 %v446, 108
      %v466 = vpop.permute.xlu0 %465
      %467 = vrot.lane.b32.xlu0 %v447, 108
      %v468 = vpop.permute.xlu0 %467
      %469 = vrot.lane.b32.xlu0 %v448, 108
      %v470 = vpop.permute.xlu0 %469
      %471 = vrot.lane.b32.xlu0 %v449, 108
      %v472 = vpop.permute.xlu0 %471
      %473 = vrot.lane.b32.xlu0 %v450, 108
      %v474 = vpop.permute.xlu0 %473
      %v475 = vrot.slane %v460, 4
      %v476 = vrot.slane %v462, 4
      %v477 = vrot.slane %v464, 4
      %v478 = vrot.slane %v466, 4
      %v479 = vrot.slane %v468, 4
      %v480 = vrot.slane %v470, 4
      %v481 = vrot.slane %v472, 4
      %v482 = vrot.slane %v474, 4
      %v483 = vsel %vm275, %v475, %v476
      %vm484 = vcmask 883712
      %v485 = vsel %vm484, %v460, %v483
      %v486 = vsel %vm484, %v462, %v476
      %v487 = vsel %vm275, %v477, %v478
      %v488 = vsel %vm484, %v464, %v487
      %v489 = vsel %vm484, %v466, %v478
      %v490 = vsel %vm275, %v479, %v480
      %v491 = vsel %vm484, %v468, %v490
      %v492 = vsel %vm484, %v470, %v480
      %v493 = vsel %vm275, %v481, %v482
      %v494 = vsel %vm484, %v472, %v493
      %v495 = vsel %vm484, %v474, %v482
      %504 = vst [vmem:[#allocation2 + $0xc0] sm:$0xff] %v485
      %505 = vst [vmem:[#allocation2 + $0xc8] sm:$0xf] %v486
      %506 = vst [vmem:[#allocation2 + $0xcc] sm:$0xff] %v488
      %507 = vst [vmem:[#allocation2 + $0xd4] sm:$0xf] %v489
      %508 = vst [vmem:[#allocation2 + $0xd8] sm:$0xff] %v491
      %509 = vst [vmem:[#allocation2 + $0xe0] sm:$0xf] %v492
      %510 = vst [vmem:[#allocation2 + $0xe4] sm:$0xff] %v494
      %511 = vst [vmem:[#allocation2 + $0xec] sm:$0xf] %v495
      %v512 = vld [vmem:[%s207] sm:$0xff]
      %v513 = vld [vmem:[%s207 + $0x8] sm:$0xff]
      %v514 = vld [vmem:[%s207 + $0x10] sm:$0xff]
      %v515 = vld [vmem:[%s207 + $0x18] sm:$0xff]
      %v516 = vld [vmem:[%s207 + $0x20] sm:$0xff]
      %v517 = vld [vmem:[%s207 + $0x28] sm:$0xff]
      %v518 = vld [vmem:[%s207 + $0x30] sm:$0xff]
      %v519 = vld [vmem:[%s207 + $0x38] sm:$0xff]
      %528 = vrot.lane.b32.xlu0 %v512, 107
      %v529 = vpop.permute.xlu0 %528
      %530 = vrot.lane.b32.xlu0 %v513, 107
      %v531 = vpop.permute.xlu0 %530
      %532 = vrot.lane.b32.xlu0 %v514, 107
      %v533 = vpop.permute.xlu0 %532
      %534 = vrot.lane.b32.xlu0 %v515, 107
      %v535 = vpop.permute.xlu0 %534
      %536 = vrot.lane.b32.xlu0 %v516, 107
      %v537 = vpop.permute.xlu0 %536
      %538 = vrot.lane.b32.xlu0 %v517, 107
      %v539 = vpop.permute.xlu0 %538
      %540 = vrot.lane.b32.xlu0 %v518, 107
      %v541 = vpop.permute.xlu0 %540
      %542 = vrot.lane.b32.xlu0 %v519, 107
      %v543 = vpop.permute.xlu0 %542
      %v544 = vrot.slane %v529, 4
      %v545 = vrot.slane %v531, 4
      %v546 = vrot.slane %v533, 4
      %v547 = vrot.slane %v535, 4
      %v548 = vrot.slane %v537, 4
      %v549 = vrot.slane %v539, 4
      %v550 = vrot.slane %v541, 4
      %v551 = vrot.slane %v543, 4
      %v552 = vsel %vm275, %v544, %v545
      %vm553 = vcmask 875520
      %v554 = vsel %vm553, %v529, %v552
      %v555 = vsel %vm553, %v531, %v545
      %v556 = vsel %vm275, %v546, %v547
      %v557 = vsel %vm553, %v533, %v556
      %v558 = vsel %vm553, %v535, %v547
      %v559 = vsel %vm275, %v548, %v549
      %v560 = vsel %vm553, %v537, %v559
      %v561 = vsel %vm553, %v539, %v549
      %v562 = vsel %vm275, %v550, %v551
      %v563 = vsel %vm553, %v541, %v562
      %v564 = vsel %vm553, %v543, %v551
      %573 = vst [vmem:[#allocation2 + $0xf0] sm:$0xff] %v554
      %574 = vst [vmem:[#allocation2 + $0xf8] sm:$0xf] %v555
      %575 = vst [vmem:[#allocation2 + $0xfc] sm:$0xff] %v557
      %576 = vst [vmem:[#allocation2 + $0x104] sm:$0xf] %v558
      %577 = vst [vmem:[#allocation2 + $0x108] sm:$0xff] %v560
      %578 = vst [vmem:[#allocation2 + $0x110] sm:$0xf] %v561
      %579 = vst [vmem:[#allocation2 + $0x114] sm:$0xff] %v563
      %580 = vst [vmem:[#allocation2 + $0x11c] sm:$0xf] %v564
      %v581 = vld [vmem:[%s207] sm:$0xff]
      %v582 = vld [vmem:[%s207 + $0x8] sm:$0xff]
      %v583 = vld [vmem:[%s207 + $0x10] sm:$0xff]
      %v584 = vld [vmem:[%s207 + $0x18] sm:$0xff]
      %v585 = vld [vmem:[%s207 + $0x20] sm:$0xff]
      %v586 = vld [vmem:[%s207 + $0x28] sm:$0xff]
      %v587 = vld [vmem:[%s207 + $0x30] sm:$0xff]
      %v588 = vld [vmem:[%s207 + $0x38] sm:$0xff]
      %597 = vrot.lane.b32.xlu0 %v581, 106
      %v598 = vpop.permute.xlu0 %597
      %599 = vrot.lane.b32.xlu0 %v582, 106
      %v600 = vpop.permute.xlu0 %599
      %601 = vrot.lane.b32.xlu0 %v583, 106
      %v602 = vpop.permute.xlu0 %601
      %603 = vrot.lane.b32.xlu0 %v584, 106
      %v604 = vpop.permute.xlu0 %603
      %605 = vrot.lane.b32.xlu0 %v585, 106
      %v606 = vpop.permute.xlu0 %605
      %607 = vrot.lane.b32.xlu0 %v586, 106
      %v608 = vpop.permute.xlu0 %607
      %609 = vrot.lane.b32.xlu0 %v587, 106
      %v610 = vpop.permute.xlu0 %609
      %611 = vrot.lane.b32.xlu0 %v588, 106
      %v612 = vpop.permute.xlu0 %611
      %v613 = vrot.slane %v598, 4
      %v614 = vrot.slane %v600, 4
      %v615 = vrot.slane %v602, 4
      %v616 = vrot.slane %v604, 4
      %v617 = vrot.slane %v606, 4
      %v618 = vrot.slane %v608, 4
      %v619 = vrot.slane %v610, 4
      %v620 = vrot.slane %v612, 4
      %v621 = vsel %vm275, %v613, %v614
      %vm622 = vcmask 867328
      %v623 = vsel %vm622, %v598, %v621
      %v624 = vsel %vm622, %v600, %v614
      %v625 = vsel %vm275, %v615, %v616
      %v626 = vsel %vm622, %v602, %v625
      %v627 = vsel %vm622, %v604, %v616
      %v628 = vsel %vm275, %v617, %v618
      %v629 = vsel %vm622, %v606, %v628
      %v630 = vsel %vm622, %v608, %v618
      %v631 = vsel %vm275, %v619, %v620
      %v632 = vsel %vm622, %v610, %v631
      %v633 = vsel %vm622, %v612, %v620
      %642 = vst [vmem:[#allocation2 + $0x120] sm:$0xff] %v623
      %643 = vst [vmem:[#allocation2 + $0x128] sm:$0xf] %v624
      %644 = vst [vmem:[#allocation2 + $0x12c] sm:$0xff] %v626
      %645 = vst [vmem:[#allocation2 + $0x134] sm:$0xf] %v627
      %646 = vst [vmem:[#allocation2 + $0x138] sm:$0xff] %v629
      %647 = vst [vmem:[#allocation2 + $0x140] sm:$0xf] %v630
      %648 = vst [vmem:[#allocation2 + $0x144] sm:$0xff] %v632
      %649 = vst [vmem:[#allocation2 + $0x14c] sm:$0xf] %v633
      %v650 = vld [vmem:[%s207] sm:$0xff]
      %v651 = vld [vmem:[%s207 + $0x8] sm:$0xff]
      %v652 = vld [vmem:[%s207 + $0x10] sm:$0xff]
      %v653 = vld [vmem:[%s207 + $0x18] sm:$0xff]
      %v654 = vld [vmem:[%s207 + $0x20] sm:$0xff]
      %v655 = vld [vmem:[%s207 + $0x28] sm:$0xff]
      %v656 = vld [vmem:[%s207 + $0x30] sm:$0xff]
      %v657 = vld [vmem:[%s207 + $0x38] sm:$0xff]
      %666 = vrot.lane.b32.xlu0 %v650, 105
      %v667 = vpop.permute.xlu0 %666
      %668 = vrot.lane.b32.xlu0 %v651, 105
      %v669 = vpop.permute.xlu0 %668
      %670 = vrot.lane.b32.xlu0 %v652, 105
      %v671 = vpop.permute.xlu0 %670
      %672 = vrot.lane.b32.xlu0 %v653, 105
      %v673 = vpop.permute.xlu0 %672
      %674 = vrot.lane.b32.xlu0 %v654, 105
      %v675 = vpop.permute.xlu0 %674
      %676 = vrot.lane.b32.xlu0 %v655, 105
      %v677 = vpop.permute.xlu0 %676
      %678 = vrot.lane.b32.xlu0 %v656, 105
      %v679 = vpop.permute.xlu0 %678
      %680 = vrot.lane.b32.xlu0 %v657, 105
      %v681 = vpop.permute.xlu0 %680
      %v682 = vrot.slane %v667, 4
      %v683 = vrot.slane %v669, 4
      %v684 = vrot.slane %v671, 4
      %v685 = vrot.slane %v673, 4
      %v686 = vrot.slane %v675, 4
      %v687 = vrot.slane %v677, 4
      %v688 = vrot.slane %v679, 4
      %v689 = vrot.slane %v681, 4
      %v690 = vsel %vm275, %v682, %v683
      %vm691 = vcmask 859136
      %v692 = vsel %vm691, %v667, %v690
      %v693 = vsel %vm691, %v669, %v683
      %v694 = vsel %vm275, %v684, %v685
      %v695 = vsel %vm691, %v671, %v694
      %v696 = vsel %vm691, %v673, %v685
      %v697 = vsel %vm275, %v686, %v687
      %v698 = vsel %vm691, %v675, %v697
      %v699 = vsel %vm691, %v677, %v687
      %v700 = vsel %vm275, %v688, %v689
      %v701 = vsel %vm691, %v679, %v700
      %v702 = vsel %vm691, %v681, %v689
      %711 = vst [vmem:[#allocation2 + $0x150] sm:$0xff] %v692
      %712 = vst [vmem:[#allocation2 + $0x158] sm:$0xf] %v693
      %713 = vst [vmem:[#allocation2 + $0x15c] sm:$0xff] %v695
      %714 = vst [vmem:[#allocation2 + $0x164] sm:$0xf] %v696
      %715 = vst [vmem:[#allocation2 + $0x168] sm:$0xff] %v698
      %716 = vst [vmem:[#allocation2 + $0x170] sm:$0xf] %v699
      %717 = vst [vmem:[#allocation2 + $0x174] sm:$0xff] %v701
      %718 = vst [vmem:[#allocation2 + $0x17c] sm:$0xf] %v702
      %v719 = vld [vmem:[%s207] sm:$0xff]
      %v720 = vld [vmem:[%s207 + $0x8] sm:$0xff]
      %v721 = vld [vmem:[%s207 + $0x10] sm:$0xff]
      %v722 = vld [vmem:[%s207 + $0x18] sm:$0xff]
      %v723 = vld [vmem:[%s207 + $0x20] sm:$0xff]
      %v724 = vld [vmem:[%s207 + $0x28] sm:$0xff]
      %v725 = vld [vmem:[%s207 + $0x30] sm:$0xff]
      %v726 = vld [vmem:[%s207 + $0x38] sm:$0xff]
      %735 = vrot.lane.b32.xlu0 %v719, 88
      %v736 = vpop.permute.xlu0 %735
      %737 = vrot.lane.b32.xlu0 %v720, 88
      %v738 = vpop.permute.xlu0 %737
      %739 = vrot.lane.b32.xlu0 %v721, 88
      %v740 = vpop.permute.xlu0 %739
      %741 = vrot.lane.b32.xlu0 %v722, 88
      %v742 = vpop.permute.xlu0 %741
      %743 = vrot.lane.b32.xlu0 %v723, 88
      %v744 = vpop.permute.xlu0 %743
      %745 = vrot.lane.b32.xlu0 %v724, 88
      %v746 = vpop.permute.xlu0 %745
      %747 = vrot.lane.b32.xlu0 %v725, 88
      %v748 = vpop.permute.xlu0 %747
      %749 = vrot.lane.b32.xlu0 %v726, 88
      %v750 = vpop.permute.xlu0 %749
      %v751 = vrot.slane %v736, 4
      %v752 = vrot.slane %v738, 4
      %v753 = vrot.slane %v740, 4
      %v754 = vrot.slane %v742, 4
      %v755 = vrot.slane %v744, 4
      %v756 = vrot.slane %v746, 4
      %v757 = vrot.slane %v748, 4
      %v758 = vrot.slane %v750, 4
      %v759 = vsel %vm275, %v751, %v752
      %vm760 = vcmask 719872
      %v761 = vsel %vm760, %v736, %v759
      %v762 = vsel %vm760, %v738, %v752
      %v763 = vsel %vm275, %v753, %v754
      %v764 = vsel %vm760, %v740, %v763
      %v765 = vsel %vm760, %v742, %v754
      %v766 = vsel %vm275, %v755, %v756
      %v767 = vsel %vm760, %v744, %v766
      %v768 = vsel %vm760, %v746, %v756
      %v769 = vsel %vm275, %v757, %v758
      %v770 = vsel %vm760, %v748, %v769
      %v771 = vsel %vm760, %v750, %v758
      %780 = vst [vmem:[#allocation2 + $0x180] sm:$0xff] %v761
      %781 = vst [vmem:[#allocation2 + $0x188] sm:$0xf] %v762
      %782 = vst [vmem:[#allocation2 + $0x18c] sm:$0xff] %v764
      %783 = vst [vmem:[#allocation2 + $0x194] sm:$0xf] %v765
      %784 = vst [vmem:[#allocation2 + $0x198] sm:$0xff] %v767
      %785 = vst [vmem:[#allocation2 + $0x1a0] sm:$0xf] %v768
      %786 = vst [vmem:[#allocation2 + $0x1a4] sm:$0xff] %v770
      %787 = vst [vmem:[#allocation2 + $0x1ac] sm:$0xf] %v771
      %v788 = vld [vmem:[%s207] sm:$0xff]
      %v789 = vld [vmem:[%s207 + $0x8] sm:$0xff]
      %v790 = vld [vmem:[%s207 + $0x10] sm:$0xff]
      %v791 = vld [vmem:[%s207 + $0x18] sm:$0xff]
      %v792 = vld [vmem:[%s207 + $0x20] sm:$0xff]
      %v793 = vld [vmem:[%s207 + $0x28] sm:$0xff]
      %v794 = vld [vmem:[%s207 + $0x30] sm:$0xff]
      %v795 = vld [vmem:[%s207 + $0x38] sm:$0xff]
      %804 = vrot.lane.b32.xlu0 %v788, 87
      %v805 = vpop.permute.xlu0 %804
      %806 = vrot.lane.b32.xlu0 %v789, 87
      %v807 = vpop.permute.xlu0 %806
      %808 = vrot.lane.b32.xlu0 %v790, 87
      %v809 = vpop.permute.xlu0 %808
      %810 = vrot.lane.b32.xlu0 %v791, 87
      %v811 = vpop.permute.xlu0 %810
      %812 = vrot.lane.b32.xlu0 %v792, 87
      %v813 = vpop.permute.xlu0 %812
      %814 = vrot.lane.b32.xlu0 %v793, 87
      %v815 = vpop.permute.xlu0 %814
      %816 = vrot.lane.b32.xlu0 %v794, 87
      %v817 = vpop.permute.xlu0 %816
      %818 = vrot.lane.b32.xlu0 %v795, 87
      %v819 = vpop.permute.xlu0 %818
      %v820 = vrot.slane %v805, 4
      %v821 = vrot.slane %v807, 4
      %v822 = vrot.slane %v809, 4
      %v823 = vrot.slane %v811, 4
      %v824 = vrot.slane %v813, 4
      %v825 = vrot.slane %v815, 4
      %v826 = vrot.slane %v817, 4
      %v827 = vrot.slane %v819, 4
      %v828 = vsel %vm275, %v820, %v821
      %vm829 = vcmask 711680
      %v830 = vsel %vm829, %v805, %v828
      %v831 = vsel %vm829, %v807, %v821
      %v832 = vsel %vm275, %v822, %v823
      %v833 = vsel %vm829, %v809, %v832
      %v834 = vsel %vm829, %v811, %v823
      %v835 = vsel %vm275, %v824, %v825
      %v836 = vsel %vm829, %v813, %v835
      %v837 = vsel %vm829, %v815, %v825
      %v838 = vsel %vm275, %v826, %v827
      %v839 = vsel %vm829, %v817, %v838
      %v840 = vsel %vm829, %v819, %v827
      %849 = vst [vmem:[#allocation2 + $0x1b0] sm:$0xff] %v830
      %850 = vst [vmem:[#allocation2 + $0x1b8] sm:$0xf] %v831
      %851 = vst [vmem:[#allocation2 + $0x1bc] sm:$0xff] %v833
      %852 = vst [vmem:[#allocation2 + $0x1c4] sm:$0xf] %v834
      %853 = vst [vmem:[#allocation2 + $0x1c8] sm:$0xff] %v836
      %854 = vst [vmem:[#allocation2 + $0x1d0] sm:$0xf] %v837
      %855 = vst [vmem:[#allocation2 + $0x1d4] sm:$0xff] %v839
      %856 = vst [vmem:[#allocation2 + $0x1dc] sm:$0xf] %v840
      %v857 = vld [vmem:[%s207] sm:$0xff]
      %v858 = vld [vmem:[%s207 + $0x8] sm:$0xff]
      %v859 = vld [vmem:[%s207 + $0x10] sm:$0xff]
      %v860 = vld [vmem:[%s207 + $0x18] sm:$0xff]
      %v861 = vld [vmem:[%s207 + $0x20] sm:$0xff]
      %v862 = vld [vmem:[%s207 + $0x28] sm:$0xff]
      %v863 = vld [vmem:[%s207 + $0x30] sm:$0xff]
      %v864 = vld [vmem:[%s207 + $0x38] sm:$0xff]
      %873 = vrot.lane.b32.xlu0 %v857, 86
      %v874 = vpop.permute.xlu0 %873
      %875 = vrot.lane.b32.xlu0 %v858, 86
      %v876 = vpop.permute.xlu0 %875
      %877 = vrot.lane.b32.xlu0 %v859, 86
      %v878 = vpop.permute.xlu0 %877
      %879 = vrot.lane.b32.xlu0 %v860, 86
      %v880 = vpop.permute.xlu0 %879
      %881 = vrot.lane.b32.xlu0 %v861, 86
      %v882 = vpop.permute.xlu0 %881
      %883 = vrot.lane.b32.xlu0 %v862, 86
      %v884 = vpop.permute.xlu0 %883
      %885 = vrot.lane.b32.xlu0 %v863, 86
      %v886 = vpop.permute.xlu0 %885
      %887 = vrot.lane.b32.xlu0 %v864, 86
      %v888 = vpop.permute.xlu0 %887
      %v889 = vrot.slane %v874, 4
      %v890 = vrot.slane %v876, 4
      %v891 = vrot.slane %v878, 4
      %v892 = vrot.slane %v880, 4
      %v893 = vrot.slane %v882, 4
      %v894 = vrot.slane %v884, 4
      %v895 = vrot.slane %v886, 4
      %v896 = vrot.slane %v888, 4
      %v897 = vsel %vm275, %v889, %v890
      %vm898 = vcmask 703488
      %v899 = vsel %vm898, %v874, %v897
      %v900 = vsel %vm898, %v876, %v890
      %v901 = vsel %vm275, %v891, %v892
      %v902 = vsel %vm898, %v878, %v901
      %v903 = vsel %vm898, %v880, %v892
      %v904 = vsel %vm275, %v893, %v894
      %v905 = vsel %vm898, %v882, %v904
      %v906 = vsel %vm898, %v884, %v894
      %v907 = vsel %vm275, %v895, %v896
      %v908 = vsel %vm898, %v886, %v907
      %v909 = vsel %vm898, %v888, %v896
      %918 = vst [vmem:[#allocation2 + $0x1e0] sm:$0xff] %v899
      %919 = vst [vmem:[#allocation2 + $0x1e8] sm:$0xf] %v900
      %920 = vst [vmem:[#allocation2 + $0x1ec] sm:$0xff] %v902
      %921 = vst [vmem:[#allocation2 + $0x1f4] sm:$0xf] %v903
      %922 = vst [vmem:[#allocation2 + $0x1f8] sm:$0xff] %v905
      %923 = vst [vmem:[#allocation2 + $0x200] sm:$0xf] %v906
      %924 = vst [vmem:[#allocation2 + $0x204] sm:$0xff] %v908
      %925 = vst [vmem:[#allocation2 + $0x20c] sm:$0xf] %v909
      %v926 = vld [vmem:[%s207] sm:$0xff]
      %v927 = vld [vmem:[%s207 + $0x8] sm:$0xff]
      %v928 = vld [vmem:[%s207 + $0x10] sm:$0xff]
      %v929 = vld [vmem:[%s207 + $0x18] sm:$0xff]
      %v930 = vld [vmem:[%s207 + $0x20] sm:$0xff]
      %v931 = vld [vmem:[%s207 + $0x28] sm:$0xff]
      %v932 = vld [vmem:[%s207 + $0x30] sm:$0xff]
      %v933 = vld [vmem:[%s207 + $0x38] sm:$0xff]
      %942 = vrot.lane.b32.xlu0 %v926, 85
      %v943 = vpop.permute.xlu0 %942
      %944 = vrot.lane.b32.xlu0 %v927, 85
      %v945 = vpop.permute.xlu0 %944
      %946 = vrot.lane.b32.xlu0 %v928, 85
      %v947 = vpop.permute.xlu0 %946
      %948 = vrot.lane.b32.xlu0 %v929, 85
      %v949 = vpop.permute.xlu0 %948
      %950 = vrot.lane.b32.xlu0 %v930, 85
      %v951 = vpop.permute.xlu0 %950
      %952 = vrot.lane.b32.xlu0 %v931, 85
      %v953 = vpop.permute.xlu0 %952
      %954 = vrot.lane.b32.xlu0 %v932, 85
      %v955 = vpop.permute.xlu0 %954
      %956 = vrot.lane.b32.xlu0 %v933, 85
      %v957 = vpop.permute.xlu0 %956
      %v958 = vrot.slane %v943, 4
      %v959 = vrot.slane %v945, 4
      %v960 = vrot.slane %v947, 4
      %v961 = vrot.slane %v949, 4
      %v962 = vrot.slane %v951, 4
      %v963 = vrot.slane %v953, 4
      %v964 = vrot.slane %v955, 4
      %v965 = vrot.slane %v957, 4
      %v966 = vsel %vm275, %v958, %v959
      %vm967 = vcmask 695296
      %v968 = vsel %vm967, %v943, %v966
      %v969 = vsel %vm967, %v945, %v959
      %v970 = vsel %vm275, %v960, %v961
      %v971 = vsel %vm967, %v947, %v970
      %v972 = vsel %vm967, %v949, %v961
      %v973 = vsel %vm275, %v962, %v963
      %v974 = vsel %vm967, %v951, %v973
      %v975 = vsel %vm967, %v953, %v963
      %v976 = vsel %vm275, %v964, %v965
      %v977 = vsel %vm967, %v955, %v976
      %v978 = vsel %vm967, %v957, %v965
      %987 = vst [vmem:[#allocation2 + $0x210] sm:$0xff] %v968
      %988 = vst [vmem:[#allocation2 + $0x218] sm:$0xf] %v969
      %989 = vst [vmem:[#allocation2 + $0x21c] sm:$0xff] %v971
      %990 = vst [vmem:[#allocation2 + $0x224] sm:$0xf] %v972
      %991 = vst [vmem:[#allocation2 + $0x228] sm:$0xff] %v974
      %992 = vst [vmem:[#allocation2 + $0x230] sm:$0xf] %v975
      %993 = vst [vmem:[#allocation2 + $0x234] sm:$0xff] %v977
      %994 = vst [vmem:[#allocation2 + $0x23c] sm:$0xf] %v978
      %v995 = vld [vmem:[%s207] sm:$0xff]
      %v996 = vld [vmem:[%s207 + $0x8] sm:$0xff]
      %v997 = vld [vmem:[%s207 + $0x10] sm:$0xff]
      %v998 = vld [vmem:[%s207 + $0x18] sm:$0xff]
      %v999 = vld [vmem:[%s207 + $0x20] sm:$0xff]
      %v1000 = vld [vmem:[%s207 + $0x28] sm:$0xff]
      %v1001 = vld [vmem:[%s207 + $0x30] sm:$0xff]
      %v1002 = vld [vmem:[%s207 + $0x38] sm:$0xff]
      %1011 = vrot.lane.b32.xlu0 %v995, 68
      %v1012 = vpop.permute.xlu0 %1011
      %1013 = vrot.lane.b32.xlu0 %v996, 68
      %v1014 = vpop.permute.xlu0 %1013
      %1015 = vrot.lane.b32.xlu0 %v997, 68
      %v1016 = vpop.permute.xlu0 %1015
      %1017 = vrot.lane.b32.xlu0 %v998, 68
      %v1018 = vpop.permute.xlu0 %1017
      %1019 = vrot.lane.b32.xlu0 %v999, 68
      %v1020 = vpop.permute.xlu0 %1019
      %1021 = vrot.lane.b32.xlu0 %v1000, 68
      %v1022 = vpop.permute.xlu0 %1021
      %1023 = vrot.lane.b32.xlu0 %v1001, 68
      %v1024 = vpop.permute.xlu0 %1023
      %1025 = vrot.lane.b32.xlu0 %v1002, 68
      %v1026 = vpop.permute.xlu0 %1025
      %v1027 = vrot.slane %v1012, 4
      %v1028 = vrot.slane %v1014, 4
      %v1029 = vrot.slane %v1016, 4
      %v1030 = vrot.slane %v1018, 4
      %v1031 = vrot.slane %v1020, 4
      %v1032 = vrot.slane %v1022, 4
      %v1033 = vrot.slane %v1024, 4
      %v1034 = vrot.slane %v1026, 4
      %v1035 = vsel %vm275, %v1027, %v1028
      %vm1036 = vcmask 556032
      %v1037 = vsel %vm1036, %v1012, %v1035
      %v1038 = vsel %vm1036, %v1014, %v1028
      %v1039 = vsel %vm275, %v1029, %v1030
      %v1040 = vsel %vm1036, %v1016, %v1039
      %v1041 = vsel %vm1036, %v1018, %v1030
      %v1042 = vsel %vm275, %v1031, %v1032
      %v1043 = vsel %vm1036, %v1020, %v1042
      %v1044 = vsel %vm1036, %v1022, %v1032
      %v1045 = vsel %vm275, %v1033, %v1034
      %v1046 = vsel %vm1036, %v1024, %v1045
      %v1047 = vsel %vm1036, %v1026, %v1034
      %1056 = vst [vmem:[#allocation2 + $0x240] sm:$0xff] %v1037
      %1057 = vst [vmem:[#allocation2 + $0x248] sm:$0xf] %v1038
      %1058 = vst [vmem:[#allocation2 + $0x24c] sm:$0xff] %v1040
      %1059 = vst [vmem:[#allocation2 + $0x254] sm:$0xf] %v1041
      %1060 = vst [vmem:[#allocation2 + $0x258] sm:$0xff] %v1043
      %1061 = vst [vmem:[#allocation2 + $0x260] sm:$0xf] %v1044
      %1062 = vst [vmem:[#allocation2 + $0x264] sm:$0xff] %v1046
      %1063 = vst [vmem:[#allocation2 + $0x26c] sm:$0xf] %v1047
      %v1064 = vld [vmem:[%s207] sm:$0xff]
      %v1065 = vld [vmem:[%s207 + $0x8] sm:$0xff]
      %v1066 = vld [vmem:[%s207 + $0x10] sm:$0xff]
      %v1067 = vld [vmem:[%s207 + $0x18] sm:$0xff]
      %v1068 = vld [vmem:[%s207 + $0x20] sm:$0xff]
      %v1069 = vld [vmem:[%s207 + $0x28] sm:$0xff]
      %v1070 = vld [vmem:[%s207 + $0x30] sm:$0xff]
      %v1071 = vld [vmem:[%s207 + $0x38] sm:$0xff]
      %1080 = vrot.lane.b32.xlu0 %v1064, 67
      %v1081 = vpop.permute.xlu0 %1080
      %1082 = vrot.lane.b32.xlu0 %v1065, 67
      %v1083 = vpop.permute.xlu0 %1082
      %1084 = vrot.lane.b32.xlu0 %v1066, 67
      %v1085 = vpop.permute.xlu0 %1084
      %1086 = vrot.lane.b32.xlu0 %v1067, 67
      %v1087 = vpop.permute.xlu0 %1086
      %1088 = vrot.lane.b32.xlu0 %v1068, 67
      %v1089 = vpop.permute.xlu0 %1088
      %1090 = vrot.lane.b32.xlu0 %v1069, 67
      %v1091 = vpop.permute.xlu0 %1090
      %1092 = vrot.lane.b32.xlu0 %v1070, 67
      %v1093 = vpop.permute.xlu0 %1092
      %1094 = vrot.lane.b32.xlu0 %v1071, 67
      %v1095 = vpop.permute.xlu0 %1094
      %v1096 = vrot.slane %v1081, 4
      %v1097 = vrot.slane %v1083, 4
      %v1098 = vrot.slane %v1085, 4
      %v1099 = vrot.slane %v1087, 4
      %v1100 = vrot.slane %v1089, 4
      %v1101 = vrot.slane %v1091, 4
      %v1102 = vrot.slane %v1093, 4
      %v1103 = vrot.slane %v1095, 4
      %v1104 = vsel %vm275, %v1096, %v1097
      %vm1105 = vcmask 547840
      %v1106 = vsel %vm1105, %v1081, %v1104
      %v1107 = vsel %vm1105, %v1083, %v1097
      %v1108 = vsel %vm275, %v1098, %v1099
      %v1109 = vsel %vm1105, %v1085, %v1108
      %v1110 = vsel %vm1105, %v1087, %v1099
      %v1111 = vsel %vm275, %v1100, %v1101
      %v1112 = vsel %vm1105, %v1089, %v1111
      %v1113 = vsel %vm1105, %v1091, %v1101
      %v1114 = vsel %vm275, %v1102, %v1103
      %v1115 = vsel %vm1105, %v1093, %v1114
      %v1116 = vsel %vm1105, %v1095, %v1103
      %1125 = vst [vmem:[#allocation2 + $0x270] sm:$0xff] %v1106
      %1126 = vst [vmem:[#allocation2 + $0x278] sm:$0xf] %v1107
      %1127 = vst [vmem:[#allocation2 + $0x27c] sm:$0xff] %v1109
      %1128 = vst [vmem:[#allocation2 + $0x284] sm:$0xf] %v1110
      %1129 = vst [vmem:[#allocation2 + $0x288] sm:$0xff] %v1112
      %1130 = vst [vmem:[#allocation2 + $0x290] sm:$0xf] %v1113
      %1131 = vst [vmem:[#allocation2 + $0x294] sm:$0xff] %v1115
      %1132 = vst [vmem:[#allocation2 + $0x29c] sm:$0xf] %v1116
      %v1133 = vld [vmem:[%s207] sm:$0xff]
      %v1134 = vld [vmem:[%s207 + $0x8] sm:$0xff]
      %v1135 = vld [vmem:[%s207 + $0x10] sm:$0xff]
      %v1136 = vld [vmem:[%s207 + $0x18] sm:$0xff]
      %v1137 = vld [vmem:[%s207 + $0x20] sm:$0xff]
      %v1138 = vld [vmem:[%s207 + $0x28] sm:$0xff]
      %v1139 = vld [vmem:[%s207 + $0x30] sm:$0xff]
      %v1140 = vld [vmem:[%s207 + $0x38] sm:$0xff]
      %1149 = vrot.lane.b32.xlu0 %v1133, 66
      %v1150 = vpop.permute.xlu0 %1149
      %1151 = vrot.lane.b32.xlu0 %v1134, 66
      %v1152 = vpop.permute.xlu0 %1151
      %1153 = vrot.lane.b32.xlu0 %v1135, 66
      %v1154 = vpop.permute.xlu0 %1153
      %1155 = vrot.lane.b32.xlu0 %v1136, 66
      %v1156 = vpop.permute.xlu0 %1155
      %1157 = vrot.lane.b32.xlu0 %v1137, 66
      %v1158 = vpop.permute.xlu0 %1157
      %1159 = vrot.lane.b32.xlu0 %v1138, 66
      %v1160 = vpop.permute.xlu0 %1159
      %1161 = vrot.lane.b32.xlu0 %v1139, 66
      %v1162 = vpop.permute.xlu0 %1161
      %1163 = vrot.lane.b32.xlu0 %v1140, 66
      %v1164 = vpop.permute.xlu0 %1163
      %v1165 = vrot.slane %v1150, 4
      %v1166 = vrot.slane %v1152, 4
      %v1167 = vrot.slane %v1154, 4
      %v1168 = vrot.slane %v1156, 4
      %v1169 = vrot.slane %v1158, 4
      %v1170 = vrot.slane %v1160, 4
      %v1171 = vrot.slane %v1162, 4
      %v1172 = vrot.slane %v1164, 4
      %v1173 = vsel %vm275, %v1165, %v1166
      %vm1174 = vcmask 539648
      %v1175 = vsel %vm1174, %v1150, %v1173
      %v1176 = vsel %vm1174, %v1152, %v1166
      %v1177 = vsel %vm275, %v1167, %v1168
      %v1178 = vsel %vm1174, %v1154, %v1177
      %v1179 = vsel %vm1174, %v1156, %v1168
      %v1180 = vsel %vm275, %v1169, %v1170
      %v1181 = vsel %vm1174, %v1158, %v1180
      %v1182 = vsel %vm1174, %v1160, %v1170
      %v1183 = vsel %vm275, %v1171, %v1172
      %v1184 = vsel %vm1174, %v1162, %v1183
      %v1185 = vsel %vm1174, %v1164, %v1172
      %1194 = vst [vmem:[#allocation2 + $0x2a0] sm:$0xff] %v1175
      %1195 = vst [vmem:[#allocation2 + $0x2a8] sm:$0xf] %v1176
      %1196 = vst [vmem:[#allocation2 + $0x2ac] sm:$0xff] %v1178
      %1197 = vst [vmem:[#allocation2 + $0x2b4] sm:$0xf] %v1179
      %1198 = vst [vmem:[#allocation2 + $0x2b8] sm:$0xff] %v1181
      %1199 = vst [vmem:[#allocation2 + $0x2c0] sm:$0xf] %v1182
      %1200 = vst [vmem:[#allocation2 + $0x2c4] sm:$0xff] %v1184
      %1201 = vst [vmem:[#allocation2 + $0x2cc] sm:$0xf] %v1185
      %v1202 = vld [vmem:[%s207] sm:$0xff]
      %v1203 = vld [vmem:[%s207 + $0x8] sm:$0xff]
      %v1204 = vld [vmem:[%s207 + $0x10] sm:$0xff]
      %v1205 = vld [vmem:[%s207 + $0x18] sm:$0xff]
      %v1206 = vld [vmem:[%s207 + $0x20] sm:$0xff]
      %v1207 = vld [vmem:[%s207 + $0x28] sm:$0xff]
      %v1208 = vld [vmem:[%s207 + $0x30] sm:$0xff]
      %v1209 = vld [vmem:[%s207 + $0x38] sm:$0xff]
      %1218 = vrot.lane.b32.xlu0 %v1202, 65
      %v1219 = vpop.permute.xlu0 %1218
      %1220 = vrot.lane.b32.xlu0 %v1203, 65
      %v1221 = vpop.permute.xlu0 %1220
      %1222 = vrot.lane.b32.xlu0 %v1204, 65
      %v1223 = vpop.permute.xlu0 %1222
      %1224 = vrot.lane.b32.xlu0 %v1205, 65
      %v1225 = vpop.permute.xlu0 %1224
      %1226 = vrot.lane.b32.xlu0 %v1206, 65
      %v1227 = vpop.permute.xlu0 %1226
      %1228 = vrot.lane.b32.xlu0 %v1207, 65
      %v1229 = vpop.permute.xlu0 %1228
      %1230 = vrot.lane.b32.xlu0 %v1208, 65
      %v1231 = vpop.permute.xlu0 %1230
      %1232 = vrot.lane.b32.xlu0 %v1209, 65
      %v1233 = vpop.permute.xlu0 %1232
      %v1234 = vrot.slane %v1219, 4
      %v1235 = vrot.slane %v1221, 4
      %v1236 = vrot.slane %v1223, 4
      %v1237 = vrot.slane %v1225, 4
      %v1238 = vrot.slane %v1227, 4
      %v1239 = vrot.slane %v1229, 4
      %v1240 = vrot.slane %v1231, 4
      %v1241 = vrot.slane %v1233, 4
      %v1242 = vsel %vm275, %v1234, %v1235
      %vm1243 = vcmask 531456
      %v1244 = vsel %vm1243, %v1219, %v1242
      %v1245 = vsel %vm1243, %v1221, %v1235
      %v1246 = vsel %vm275, %v1236, %v1237
      %v1247 = vsel %vm1243, %v1223, %v1246
      %v1248 = vsel %vm1243, %v1225, %v1237
      %v1249 = vsel %vm275, %v1238, %v1239
      %v1250 = vsel %vm1243, %v1227, %v1249
      %v1251 = vsel %vm1243, %v1229, %v1239
      %v1252 = vsel %vm275, %v1240, %v1241
      %v1253 = vsel %vm1243, %v1231, %v1252
      %v1254 = vsel %vm1243, %v1233, %v1241
      %1263 = vst [vmem:[#allocation2 + $0x2d0] sm:$0xff] %v1244
      %1264 = vst [vmem:[#allocation2 + $0x2d8] sm:$0xf] %v1245
      %1265 = vst [vmem:[#allocation2 + $0x2dc] sm:$0xff] %v1247
      %1266 = vst [vmem:[#allocation2 + $0x2e4] sm:$0xf] %v1248
      %1267 = vst [vmem:[#allocation2 + $0x2e8] sm:$0xff] %v1250
      %1268 = vst [vmem:[#allocation2 + $0x2f0] sm:$0xf] %v1251
      %1269 = vst [vmem:[#allocation2 + $0x2f4] sm:$0xff] %v1253
      %1270 = vst [vmem:[#allocation2 + $0x2fc] sm:$0xf] %v1254
      %v1271 = vld [vmem:[%s1] sm:$0xff]
      %v1272 = vld [vmem:[%s1 + $0x8] sm:$0xff]
      %v1273 = vld [vmem:[%s1 + $0x10] sm:$0xff]
      %v1274 = vld [vmem:[%s1 + $0x18] sm:$0xff]
      %v1275 = vld [vmem:[%s1 + $0x20] sm:$0xff]
      %v1276 = vld [vmem:[%s1 + $0x28] sm:$0xff]
      %v1277 = vld [vmem:[%s1 + $0x30] sm:$0xff]
      %v1278 = vld [vmem:[%s1 + $0x38] sm:$0xff]
      %v1279 = vld [vmem:[#allocation2] sm:$0xff]
      %v1280 = vld [vmem:[#allocation2 + $0x8] sm:$0xf]
      %v1281 = vld [vmem:[#allocation2 + $0xc] sm:$0xff]
      %v1282 = vld [vmem:[#allocation2 + $0x14] sm:$0xf]
      %v1283 = vld [vmem:[#allocation2 + $0x18] sm:$0xff]
      %v1284 = vld [vmem:[#allocation2 + $0x20] sm:$0xf]
      %v1285 = vld [vmem:[#allocation2 + $0x24] sm:$0xff]
      %v1286 = vld [vmem:[#allocation2 + $0x2c] sm:$0xf]
      %v1287 = vld [vmem:[#allocation2 + $0x30] sm:$0xff]
      %v1288 = vld [vmem:[#allocation2 + $0x38] sm:$0xf]
      %v1289 = vld [vmem:[#allocation2 + $0x3c] sm:$0xff]
      %v1290 = vld [vmem:[#allocation2 + $0x44] sm:$0xf]
      %v1291 = vld [vmem:[#allocation2 + $0x48] sm:$0xff]
      %v1292 = vld [vmem:[#allocation2 + $0x50] sm:$0xf]
      %v1293 = vld [vmem:[#allocation2 + $0x54] sm:$0xff]
      %v1294 = vld [vmem:[#allocation2 + $0x5c] sm:$0xf]
      %v1295 = vld [vmem:[#allocation2 + $0x60] sm:$0xff]
      %v1296 = vld [vmem:[#allocation2 + $0x68] sm:$0xf]
      %v1297 = vld [vmem:[#allocation2 + $0x6c] sm:$0xff]
      %v1298 = vld [vmem:[#allocation2 + $0x74] sm:$0xf]
      %v1299 = vld [vmem:[#allocation2 + $0x78] sm:$0xff]
      %v1300 = vld [vmem:[#allocation2 + $0x80] sm:$0xf]
      %v1301 = vld [vmem:[#allocation2 + $0x84] sm:$0xff]
      %v1302 = vld [vmem:[#allocation2 + $0x8c] sm:$0xf]
      %v1303 = vld [vmem:[#allocation2 + $0x90] sm:$0xff]
      %v1304 = vld [vmem:[#allocation2 + $0x98] sm:$0xf]
      %v1305 = vld [vmem:[#allocation2 + $0x9c] sm:$0xff]
      %v1306 = vld [vmem:[#allocation2 + $0xa4] sm:$0xf]
      %v1307 = vld [vmem:[#allocation2 + $0xa8] sm:$0xff]
      %v1308 = vld [vmem:[#allocation2 + $0xb0] sm:$0xf]
      %v1309 = vld [vmem:[#allocation2 + $0xb4] sm:$0xff]
      %v1310 = vld [vmem:[#allocation2 + $0xbc] sm:$0xf]
      %v1311 = vld [vmem:[#allocation2 + $0xc0] sm:$0xff]
      %v1312 = vld [vmem:[#allocation2 + $0xc8] sm:$0xf]
      %v1313 = vld [vmem:[#allocation2 + $0xcc] sm:$0xff]
      %v1314 = vld [vmem:[#allocation2 + $0xd4] sm:$0xf]
      %v1315 = vld [vmem:[#allocation2 + $0xd8] sm:$0xff]
      %v1316 = vld [vmem:[#allocation2 + $0xe0] sm:$0xf]
      %v1317 = vld [vmem:[#allocation2 + $0xe4] sm:$0xff]
      %v1318 = vld [vmem:[#allocation2 + $0xec] sm:$0xf]
      %v1319 = vld [vmem:[#allocation2 + $0xf0] sm:$0xff]
      %v1320 = vld [vmem:[#allocation2 + $0xf8] sm:$0xf]
      %v1321 = vld [vmem:[#allocation2 + $0xfc] sm:$0xff]
      %v1322 = vld [vmem:[#allocation2 + $0x104] sm:$0xf]
      %v1323 = vld [vmem:[#allocation2 + $0x108] sm:$0xff]
      %v1324 = vld [vmem:[#allocation2 + $0x110] sm:$0xf]
      %v1325 = vld [vmem:[#allocation2 + $0x114] sm:$0xff]
      %v1326 = vld [vmem:[#allocation2 + $0x11c] sm:$0xf]
      %v1327 = vld [vmem:[#allocation2 + $0x120] sm:$0xff]
      %v1328 = vld [vmem:[#allocation2 + $0x128] sm:$0xf]
      %v1329 = vld [vmem:[#allocation2 + $0x12c] sm:$0xff]
      %v1330 = vld [vmem:[#allocation2 + $0x134] sm:$0xf]
      %v1331 = vld [vmem:[#allocation2 + $0x138] sm:$0xff]
      %v1332 = vld [vmem:[#allocation2 + $0x140] sm:$0xf]
      %v1333 = vld [vmem:[#allocation2 + $0x144] sm:$0xff]
      %v1334 = vld [vmem:[#allocation2 + $0x14c] sm:$0xf]
      %v1335 = vld [vmem:[#allocation2 + $0x150] sm:$0xff]
      %v1336 = vld [vmem:[#allocation2 + $0x158] sm:$0xf]
      %v1337 = vld [vmem:[#allocation2 + $0x15c] sm:$0xff]
      %v1338 = vld [vmem:[#allocation2 + $0x164] sm:$0xf]
      %v1339 = vld [vmem:[#allocation2 + $0x168] sm:$0xff]
      %v1340 = vld [vmem:[#allocation2 + $0x170] sm:$0xf]
      %v1341 = vld [vmem:[#allocation2 + $0x174] sm:$0xff]
      %v1342 = vld [vmem:[#allocation2 + $0x17c] sm:$0xf]
      %v1343 = vld [vmem:[#allocation2 + $0x180] sm:$0xff]
      %v1344 = vld [vmem:[#allocation2 + $0x188] sm:$0xf]
      %v1345 = vld [vmem:[#allocation2 + $0x18c] sm:$0xff]
      %v1346 = vld [vmem:[#allocation2 + $0x194] sm:$0xf]
      %v1347 = vld [vmem:[#allocation2 + $0x198] sm:$0xff]
      %v1348 = vld [vmem:[#allocation2 + $0x1a0] sm:$0xf]
      %v1349 = vld [vmem:[#allocation2 + $0x1a4] sm:$0xff]
      %v1350 = vld [vmem:[#allocation2 + $0x1ac] sm:$0xf]
      %v1351 = vld [vmem:[#allocation2 + $0x1b0] sm:$0xff]
      %v1352 = vld [vmem:[#allocation2 + $0x1b8] sm:$0xf]
      %v1353 = vld [vmem:[#allocation2 + $0x1bc] sm:$0xff]
      %v1354 = vld [vmem:[#allocation2 + $0x1c4] sm:$0xf]
      %v1355 = vld [vmem:[#allocation2 + $0x1c8] sm:$0xff]
      %v1356 = vld [vmem:[#allocation2 + $0x1d0] sm:$0xf]
      %v1357 = vld [vmem:[#allocation2 + $0x1d4] sm:$0xff]
      %v1358 = vld [vmem:[#allocation2 + $0x1dc] sm:$0xf]
      %v1359 = vld [vmem:[#allocation2 + $0x1e0] sm:$0xff]
      %v1360 = vld [vmem:[#allocation2 + $0x1e8] sm:$0xf]
      %v1361 = vld [vmem:[#allocation2 + $0x1ec] sm:$0xff]
      %v1362 = vld [vmem:[#allocation2 + $0x1f4] sm:$0xf]
      %v1363 = vld [vmem:[#allocation2 + $0x1f8] sm:$0xff]
      %v1364 = vld [vmem:[#allocation2 + $0x200] sm:$0xf]
      %v1365 = vld [vmem:[#allocation2 + $0x204] sm:$0xff]
      %v1366 = vld [vmem:[#allocation2 + $0x20c] sm:$0xf]
      %v1367 = vld [vmem:[#allocation2 + $0x210] sm:$0xff]
      %v1368 = vld [vmem:[#allocation2 + $0x218] sm:$0xf]
      %v1369 = vld [vmem:[#allocation2 + $0x21c] sm:$0xff]
      %v1370 = vld [vmem:[#allocation2 + $0x224] sm:$0xf]
      %v1371 = vld [vmem:[#allocation2 + $0x228] sm:$0xff]
      %v1372 = vld [vmem:[#allocation2 + $0x230] sm:$0xf]
      %v1373 = vld [vmem:[#allocation2 + $0x234] sm:$0xff]
      %v1374 = vld [vmem:[#allocation2 + $0x23c] sm:$0xf]
      %v1375 = vld [vmem:[#allocation2 + $0x240] sm:$0xff]
      %v1376 = vld [vmem:[#allocation2 + $0x248] sm:$0xf]
      %v1377 = vld [vmem:[#allocation2 + $0x24c] sm:$0xff]
      %v1378 = vld [vmem:[#allocation2 + $0x254] sm:$0xf]
      %v1379 = vld [vmem:[#allocation2 + $0x258] sm:$0xff]
      %v1380 = vld [vmem:[#allocation2 + $0x260] sm:$0xf]
      %v1381 = vld [vmem:[#allocation2 + $0x264] sm:$0xff]
      %v1382 = vld [vmem:[#allocation2 + $0x26c] sm:$0xf]
      %v1383 = vld [vmem:[#allocation2 + $0x270] sm:$0xff]
      %v1384 = vld [vmem:[#allocation2 + $0x278] sm:$0xf]
      %v1385 = vld [vmem:[#allocation2 + $0x27c] sm:$0xff]
      %v1386 = vld [vmem:[#allocation2 + $0x284] sm:$0xf]
      %v1387 = vld [vmem:[#allocation2 + $0x288] sm:$0xff]
      %v1388 = vld [vmem:[#allocation2 + $0x290] sm:$0xf]
      %v1389 = vld [vmem:[#allocation2 + $0x294] sm:$0xff]
      %v1390 = vld [vmem:[#allocation2 + $0x29c] sm:$0xf]
      %v1391 = vld [vmem:[#allocation2 + $0x2a0] sm:$0xff]
      %v1392 = vld [vmem:[#allocation2 + $0x2a8] sm:$0xf]
      %v1393 = vld [vmem:[#allocation2 + $0x2ac] sm:$0xff]
      %v1394 = vld [vmem:[#allocation2 + $0x2b4] sm:$0xf]
      %v1395 = vld [vmem:[#allocation2 + $0x2b8] sm:$0xff]
      %v1396 = vld [vmem:[#allocation2 + $0x2c0] sm:$0xf]
      %v1397 = vld [vmem:[#allocation2 + $0x2c4] sm:$0xff]
      %v1398 = vld [vmem:[#allocation2 + $0x2cc] sm:$0xf]
      %v1399 = vld [vmem:[#allocation2 + $0x2d0] sm:$0xff]
      %v1400 = vld [vmem:[#allocation2 + $0x2d8] sm:$0xf]
      %v1401 = vld [vmem:[#allocation2 + $0x2dc] sm:$0xff]
      %v1402 = vld [vmem:[#allocation2 + $0x2e4] sm:$0xf]
      %v1403 = vld [vmem:[#allocation2 + $0x2e8] sm:$0xff]
      %v1404 = vld [vmem:[#allocation2 + $0x2f0] sm:$0xf]
      %v1405 = vld [vmem:[#allocation2 + $0x2f4] sm:$0xff]
      %v1406 = vld [vmem:[#allocation2 + $0x2fc] sm:$0xf]
      %v1407 = vld [vmem:[%s2] sm:$0xff]
      %v1408 = vld [vmem:[%s2 + $0x8] sm:$0xff]
      %v1409 = vld [vmem:[%s2 + $0x10] sm:$0xff]
      %v1410 = vld [vmem:[%s2 + $0x18] sm:$0xff]
      %1412 = vset.pattern.permute.xlu0 0
      %1413 = vperm.xlu0 %1412, %v1407
      %v1414 = vpop.permute.xlu0 %1413
      %1417 = vset.pattern.permute.xlu0 0
      %1418 = vperm.xlu0 %1417, %v1408
      %v1419 = vpop.permute.xlu0 %1418
      %1422 = vset.pattern.permute.xlu0 0
      %1423 = vperm.xlu0 %1422, %v1409
      %v1424 = vpop.permute.xlu0 %1423
      %1427 = vset.pattern.permute.xlu0 0
      %1428 = vperm.xlu0 %1427, %v1410
      %v1429 = vpop.permute.xlu0 %1428
      %v1439 = vunpack.c.l.b16 %v1271
      %v1440 = vunpack.c.h.b16 %v1271
      %v1441 = vunpack.c.l.b16 %v1272
      %v1442 = vunpack.c.h.b16 %v1272
      %v1443 = vunpack.c.l.b16 %v1273
      %v1444 = vunpack.c.h.b16 %v1273
      %v1445 = vunpack.c.l.b16 %v1274
      %v1446 = vunpack.c.h.b16 %v1274
      %v1447 = vunpack.c.l.b16 %v1275
      %v1448 = vunpack.c.h.b16 %v1275
      %v1449 = vunpack.c.l.b16 %v1276
      %v1450 = vunpack.c.h.b16 %v1276
      %v1451 = vunpack.c.l.b16 %v1277
      %v1452 = vunpack.c.h.b16 %v1277
      %v1453 = vunpack.c.l.b16 %v1278
      %v1454 = vunpack.c.h.b16 %v1278
      %v1455 = vpack.c.b16 %v1443, %v1439
      %v1456 = vpack.c.b16 %v1444, %v1440
      %v1457 = vpack.c.b16 %v1445, %v1441
      %v1458 = vpack.c.b16 %v1446, %v1442
      %v1459 = vpack.c.b16 %v1451, %v1447
      %v1460 = vpack.c.b16 %v1452, %v1448
      %v1461 = vpack.c.b16 %v1453, %v1449
      %v1462 = vpack.c.b16 %v1454, %v1450
      %v1599 = vunpack.c.l.b16 %v1279
      %v1600 = vunpack.c.h.b16 %v1279
      %v1601 = vunpack.c.l.b16 %v1280
      %v1602 = vunpack.c.l.b16 %v1281
      %v1603 = vunpack.c.h.b16 %v1281
      %v1604 = vunpack.c.l.b16 %v1282
      %v1605 = vunpack.c.l.b16 %v1283
      %v1606 = vunpack.c.h.b16 %v1283
      %v1607 = vunpack.c.l.b16 %v1284
      %v1608 = vunpack.c.l.b16 %v1285
      %v1609 = vunpack.c.h.b16 %v1285
      %v1610 = vunpack.c.l.b16 %v1286
      %v1611 = vunpack.c.l.b16 %v1287
      %v1612 = vunpack.c.h.b16 %v1287
      %v1613 = vunpack.c.l.b16 %v1288
      %v1614 = vunpack.c.l.b16 %v1289
      %v1615 = vunpack.c.h.b16 %v1289
      %v1616 = vunpack.c.l.b16 %v1290
      %v1617 = vunpack.c.l.b16 %v1291
      %v1618 = vunpack.c.h.b16 %v1291
      %v1619 = vunpack.c.l.b16 %v1292
      %v1620 = vunpack.c.l.b16 %v1293
      %v1621 = vunpack.c.h.b16 %v1293
      %v1622 = vunpack.c.l.b16 %v1294
      %v1623 = vunpack.c.l.b16 %v1295
      %v1624 = vunpack.c.h.b16 %v1295
      %v1625 = vunpack.c.l.b16 %v1296
      %v1626 = vunpack.c.l.b16 %v1297
      %v1627 = vunpack.c.h.b16 %v1297
      %v1628 = vunpack.c.l.b16 %v1298
      %v1629 = vunpack.c.l.b16 %v1299
      %v1630 = vunpack.c.h.b16 %v1299
      %v1631 = vunpack.c.l.b16 %v1300
      %v1632 = vunpack.c.l.b16 %v1301
      %v1633 = vunpack.c.h.b16 %v1301
      %v1634 = vunpack.c.l.b16 %v1302
      %v1635 = vunpack.c.l.b16 %v1303
      %v1636 = vunpack.c.h.b16 %v1303
      %v1637 = vunpack.c.l.b16 %v1304
      %v1638 = vunpack.c.l.b16 %v1305
      %v1639 = vunpack.c.h.b16 %v1305
      %v1640 = vunpack.c.l.b16 %v1306
      %v1641 = vunpack.c.l.b16 %v1307
      %v1642 = vunpack.c.h.b16 %v1307
      %v1643 = vunpack.c.l.b16 %v1308
      %v1644 = vunpack.c.l.b16 %v1309
      %v1645 = vunpack.c.h.b16 %v1309
      %v1646 = vunpack.c.l.b16 %v1310
      %v1647 = vunpack.c.l.b16 %v1311
      %v1648 = vunpack.c.h.b16 %v1311
      %v1649 = vunpack.c.l.b16 %v1312
      %v1650 = vunpack.c.l.b16 %v1313
      %v1651 = vunpack.c.h.b16 %v1313
      %v1652 = vunpack.c.l.b16 %v1314
      %v1653 = vunpack.c.l.b16 %v1315
      %v1654 = vunpack.c.h.b16 %v1315
      %v1655 = vunpack.c.l.b16 %v1316
      %v1656 = vunpack.c.l.b16 %v1317
      %v1657 = vunpack.c.h.b16 %v1317
      %v1658 = vunpack.c.l.b16 %v1318
      %v1659 = vunpack.c.l.b16 %v1319
      %v1660 = vunpack.c.h.b16 %v1319
      %v1661 = vunpack.c.l.b16 %v1320
      %v1662 = vunpack.c.l.b16 %v1321
      %v1663 = vunpack.c.h.b16 %v1321
      %v1664 = vunpack.c.l.b16 %v1322
      %v1665 = vunpack.c.l.b16 %v1323
      %v1666 = vunpack.c.h.b16 %v1323
      %v1667 = vunpack.c.l.b16 %v1324
      %v1668 = vunpack.c.l.b16 %v1325
      %v1669 = vunpack.c.h.b16 %v1325
      %v1670 = vunpack.c.l.b16 %v1326
      %v1671 = vunpack.c.l.b16 %v1327
      %v1672 = vunpack.c.h.b16 %v1327
      %v1673 = vunpack.c.l.b16 %v1328
      %v1674 = vunpack.c.l.b16 %v1329
      %v1675 = vunpack.c.h.b16 %v1329
      %v1676 = vunpack.c.l.b16 %v1330
      %v1677 = vunpack.c.l.b16 %v1331
      %v1678 = vunpack.c.h.b16 %v1331
      %v1679 = vunpack.c.l.b16 %v1332
      %v1680 = vunpack.c.l.b16 %v1333
      %v1681 = vunpack.c.h.b16 %v1333
      %v1682 = vunpack.c.l.b16 %v1334
      %v1683 = vunpack.c.l.b16 %v1335
      %v1684 = vunpack.c.h.b16 %v1335
      %v1685 = vunpack.c.l.b16 %v1336
      %v1686 = vunpack.c.l.b16 %v1337
      %v1687 = vunpack.c.h.b16 %v1337
      %v1688 = vunpack.c.l.b16 %v1338
      %v1689 = vunpack.c.l.b16 %v1339
      %v1690 = vunpack.c.h.b16 %v1339
      %v1691 = vunpack.c.l.b16 %v1340
      %v1692 = vunpack.c.l.b16 %v1341
      %v1693 = vunpack.c.h.b16 %v1341
      %v1694 = vunpack.c.l.b16 %v1342
      %v1695 = vunpack.c.l.b16 %v1343
      %v1696 = vunpack.c.h.b16 %v1343
      %v1697 = vunpack.c.l.b16 %v1344
      %v1698 = vunpack.c.l.b16 %v1345
      %v1699 = vunpack.c.h.b16 %v1345
      %v1700 = vunpack.c.l.b16 %v1346
      %v1701 = vunpack.c.l.b16 %v1347
      %v1702 = vunpack.c.h.b16 %v1347
      %v1703 = vunpack.c.l.b16 %v1348
      %v1704 = vunpack.c.l.b16 %v1349
      %v1705 = vunpack.c.h.b16 %v1349
      %v1706 = vunpack.c.l.b16 %v1350
      %v1707 = vunpack.c.l.b16 %v1351
      %v1708 = vunpack.c.h.b16 %v1351
      %v1709 = vunpack.c.l.b16 %v1352
      %v1710 = vunpack.c.l.b16 %v1353
      %v1711 = vunpack.c.h.b16 %v1353
      %v1712 = vunpack.c.l.b16 %v1354
      %v1713 = vunpack.c.l.b16 %v1355
      %v1714 = vunpack.c.h.b16 %v1355
      %v1715 = vunpack.c.l.b16 %v1356
      %v1716 = vunpack.c.l.b16 %v1357
      %v1717 = vunpack.c.h.b16 %v1357
      %v1718 = vunpack.c.l.b16 %v1358
      %v1719 = vunpack.c.l.b16 %v1359
      %v1720 = vunpack.c.h.b16 %v1359
      %v1721 = vunpack.c.l.b16 %v1360
      %v1722 = vunpack.c.l.b16 %v1361
      %v1723 = vunpack.c.h.b16 %v1361
      %v1724 = vunpack.c.l.b16 %v1362
      %v1725 = vunpack.c.l.b16 %v1363
      %v1726 = vunpack.c.h.b16 %v1363
      %v1727 = vunpack.c.l.b16 %v1364
      %v1728 = vunpack.c.l.b16 %v1365
      %v1729 = vunpack.c.h.b16 %v1365
      %v1730 = vunpack.c.l.b16 %v1366
      %v1731 = vunpack.c.l.b16 %v1367
      %v1732 = vunpack.c.h.b16 %v1367
      %v1733 = vunpack.c.l.b16 %v1368
      %v1734 = vunpack.c.l.b16 %v1369
      %v1735 = vunpack.c.h.b16 %v1369
      %v1736 = vunpack.c.l.b16 %v1370
      %v1737 = vunpack.c.l.b16 %v1371
      %v1738 = vunpack.c.h.b16 %v1371
      %v1739 = vunpack.c.l.b16 %v1372
      %v1740 = vunpack.c.l.b16 %v1373
      %v1741 = vunpack.c.h.b16 %v1373
      %v1742 = vunpack.c.l.b16 %v1374
      %v1743 = vunpack.c.l.b16 %v1375
      %v1744 = vunpack.c.h.b16 %v1375
      %v1745 = vunpack.c.l.b16 %v1376
      %v1746 = vunpack.c.l.b16 %v1377
      %v1747 = vunpack.c.h.b16 %v1377
      %v1748 = vunpack.c.l.b16 %v1378
      %v1749 = vunpack.c.l.b16 %v1379
      %v1750 = vunpack.c.h.b16 %v1379
      %v1751 = vunpack.c.l.b16 %v1380
      %v1752 = vunpack.c.l.b16 %v1381
      %v1753 = vunpack.c.h.b16 %v1381
      %v1754 = vunpack.c.l.b16 %v1382
      %v1755 = vunpack.c.l.b16 %v1383
      %v1756 = vunpack.c.h.b16 %v1383
      %v1757 = vunpack.c.l.b16 %v1384
      %v1758 = vunpack.c.l.b16 %v1385
      %v1759 = vunpack.c.h.b16 %v1385
      %v1760 = vunpack.c.l.b16 %v1386
      %v1761 = vunpack.c.l.b16 %v1387
      %v1762 = vunpack.c.h.b16 %v1387
      %v1763 = vunpack.c.l.b16 %v1388
      %v1764 = vunpack.c.l.b16 %v1389
      %v1765 = vunpack.c.h.b16 %v1389
      %v1766 = vunpack.c.l.b16 %v1390
      %v1767 = vunpack.c.l.b16 %v1391
      %v1768 = vunpack.c.h.b16 %v1391
      %v1769 = vunpack.c.l.b16 %v1392
      %v1770 = vunpack.c.l.b16 %v1393
      %v1771 = vunpack.c.h.b16 %v1393
      %v1772 = vunpack.c.l.b16 %v1394
      %v1773 = vunpack.c.l.b16 %v1395
      %v1774 = vunpack.c.h.b16 %v1395
      %v1775 = vunpack.c.l.b16 %v1396
      %v1776 = vunpack.c.l.b16 %v1397
      %v1777 = vunpack.c.h.b16 %v1397
      %v1778 = vunpack.c.l.b16 %v1398
      %v1779 = vunpack.c.l.b16 %v1399
      %v1780 = vunpack.c.h.b16 %v1399
      %v1781 = vunpack.c.l.b16 %v1400
      %v1782 = vunpack.c.l.b16 %v1401
      %v1783 = vunpack.c.h.b16 %v1401
      %v1784 = vunpack.c.l.b16 %v1402
      %v1785 = vunpack.c.l.b16 %v1403
      %v1786 = vunpack.c.h.b16 %v1403
      %v1787 = vunpack.c.l.b16 %v1404
      %v1788 = vunpack.c.l.b16 %v1405
      %v1789 = vunpack.c.h.b16 %v1405
      %v1790 = vunpack.c.l.b16 %v1406
      %v1791 = vpack.c.b16 %v1602, %v1599
      %v1792 = vpack.c.b16 %v1603, %v1600
      %v1793 = vpack.c.b16 %v1604, %v1601
      %v1794 = vpack.c.b16 %v1608, %v1605
      %v1795 = vpack.c.b16 %v1609, %v1606
      %v1796 = vpack.c.b16 %v1610, %v1607
      %v1797 = vpack.c.b16 %v1614, %v1611
      %v1798 = vpack.c.b16 %v1615, %v1612
      %v1799 = vpack.c.b16 %v1616, %v1613
      %v1800 = vpack.c.b16 %v1620, %v1617
      %v1801 = vpack.c.b16 %v1621, %v1618
      %v1802 = vpack.c.b16 %v1622, %v1619
      %v1803 = vpack.c.b16 %v1626, %v1623
      %v1804 = vpack.c.b16 %v1627, %v1624
      %v1805 = vpack.c.b16 %v1628, %v1625
      %v1806 = vpack.c.b16 %v1632, %v1629
      %v1807 = vpack.c.b16 %v1633, %v1630
      %v1808 = vpack.c.b16 %v1634, %v1631
      %v1809 = vpack.c.b16 %v1638, %v1635
      %v1810 = vpack.c.b16 %v1639, %v1636
      %v1811 = vpack.c.b16 %v1640, %v1637
      %v1812 = vpack.c.b16 %v1644, %v1641
      %v1813 = vpack.c.b16 %v1645, %v1642
      %v1814 = vpack.c.b16 %v1646, %v1643
      %v1815 = vpack.c.b16 %v1650, %v1647
      %v1816 = vpack.c.b16 %v1651, %v1648
      %v1817 = vpack.c.b16 %v1652, %v1649
      %v1818 = vpack.c.b16 %v1656, %v1653
      %v1819 = vpack.c.b16 %v1657, %v1654
      %v1820 = vpack.c.b16 %v1658, %v1655
      %v1821 = vpack.c.b16 %v1662, %v1659
      %v1822 = vpack.c.b16 %v1663, %v1660
      %v1823 = vpack.c.b16 %v1664, %v1661
      %v1824 = vpack.c.b16 %v1668, %v1665
      %v1825 = vpack.c.b16 %v1669, %v1666
      %v1826 = vpack.c.b16 %v1670, %v1667
      %v1827 = vpack.c.b16 %v1674, %v1671
      %v1828 = vpack.c.b16 %v1675, %v1672
      %v1829 = vpack.c.b16 %v1676, %v1673
      %v1830 = vpack.c.b16 %v1680, %v1677
      %v1831 = vpack.c.b16 %v1681, %v1678
      %v1832 = vpack.c.b16 %v1682, %v1679
      %v1833 = vpack.c.b16 %v1686, %v1683
      %v1834 = vpack.c.b16 %v1687, %v1684
      %v1835 = vpack.c.b16 %v1688, %v1685
      %v1836 = vpack.c.b16 %v1692, %v1689
      %v1837 = vpack.c.b16 %v1693, %v1690
      %v1838 = vpack.c.b16 %v1694, %v1691
      %v1839 = vpack.c.b16 %v1698, %v1695
      %v1840 = vpack.c.b16 %v1699, %v1696
      %v1841 = vpack.c.b16 %v1700, %v1697
      %v1842 = vpack.c.b16 %v1704, %v1701
      %v1843 = vpack.c.b16 %v1705, %v1702
      %v1844 = vpack.c.b16 %v1706, %v1703
      %v1845 = vpack.c.b16 %v1710, %v1707
      %v1846 = vpack.c.b16 %v1711, %v1708
      %v1847 = vpack.c.b16 %v1712, %v1709
      %v1848 = vpack.c.b16 %v1716, %v1713
      %v1849 = vpack.c.b16 %v1717, %v1714
      %v1850 = vpack.c.b16 %v1718, %v1715
      %v1851 = vpack.c.b16 %v1722, %v1719
      %v1852 = vpack.c.b16 %v1723, %v1720
      %v1853 = vpack.c.b16 %v1724, %v1721
      %v1854 = vpack.c.b16 %v1728, %v1725
      %v1855 = vpack.c.b16 %v1729, %v1726
      %v1856 = vpack.c.b16 %v1730, %v1727
      %v1857 = vpack.c.b16 %v1734, %v1731
      %v1858 = vpack.c.b16 %v1735, %v1732
      %v1859 = vpack.c.b16 %v1736, %v1733
      %v1860 = vpack.c.b16 %v1740, %v1737
      %v1861 = vpack.c.b16 %v1741, %v1738
      %v1862 = vpack.c.b16 %v1742, %v1739
      %v1863 = vpack.c.b16 %v1746, %v1743
      %v1864 = vpack.c.b16 %v1747, %v1744
      %v1865 = vpack.c.b16 %v1748, %v1745
      %v1866 = vpack.c.b16 %v1752, %v1749
      %v1867 = vpack.c.b16 %v1753, %v1750
      %v1868 = vpack.c.b16 %v1754, %v1751
      %v1869 = vpack.c.b16 %v1758, %v1755
      %v1870 = vpack.c.b16 %v1759, %v1756
      %v1871 = vpack.c.b16 %v1760, %v1757
      %v1872 = vpack.c.b16 %v1764, %v1761
      %v1873 = vpack.c.b16 %v1765, %v1762
      %v1874 = vpack.c.b16 %v1766, %v1763
      %v1875 = vpack.c.b16 %v1770, %v1767
      %v1876 = vpack.c.b16 %v1771, %v1768
      %v1877 = vpack.c.b16 %v1772, %v1769
      %v1878 = vpack.c.b16 %v1776, %v1773
      %v1879 = vpack.c.b16 %v1777, %v1774
      %v1880 = vpack.c.b16 %v1778, %v1775
      %v1881 = vpack.c.b16 %v1782, %v1779
      %v1882 = vpack.c.b16 %v1783, %v1780
      %v1883 = vpack.c.b16 %v1784, %v1781
      %v1884 = vpack.c.b16 %v1788, %v1785
      %v1885 = vpack.c.b16 %v1789, %v1786
      %v1886 = vpack.c.b16 %v1790, %v1787
      %1983 = vmatprep.subr.bf16.mxu0 %v1813
      %1984 = vmatpush1.bf16.msra.mxu0 %v1812
      %1985 = vmatprep.subr.bf16.mxu0 %v1810
      %1986 = vmatpush1.bf16.msra.mxu0 %v1809
      %1987 = vmatprep.subr.bf16.mxu0 %v1807
      %1988 = vmatpush1.bf16.msra.mxu0 %v1806
      %1989 = vmatprep.subr.bf16.mxu0 %v1804
      %1990 = vmatpush1.bf16.msra.mxu0 %v1803
      %1991 = vmatprep.subr.bf16.mxu0 %v1801
      %1992 = vmatpush1.bf16.msra.mxu0 %v1800
      %1993 = vmatprep.subr.bf16.mxu0 %v1798
      %1994 = vmatpush1.bf16.msra.mxu0 %v1797
      %1995 = vmatprep.subr.bf16.mxu0 %v1795
      %1996 = vmatpush1.bf16.msra.mxu0 %v1794
      %1997 = vmatprep.subr.bf16.mxu0 %v1792
      %1998 = vmatpush1.bf16.msra.mxu0 %v1791
      %1999 = vmatprep.subr.bf16.mxu0 %v1837
      %2000 = vmatpush2.bf16.msra.mxu0 %v1836
      %2001 = vmatprep.subr.bf16.mxu0 %v1834
      %2002 = vmatpush2.bf16.msra.mxu0 %v1833
      %2003 = vmatprep.subr.bf16.mxu0 %v1831
      %2004 = vmatpush2.bf16.msra.mxu0 %v1830
      %2005 = vmatprep.subr.bf16.mxu0 %v1828
      %2006 = vmatpush2.bf16.msra.mxu0 %v1827
      %2007 = vmatprep.subr.bf16.mxu0 %v1825
      %2008 = vmatpush2.bf16.msra.mxu0 %v1824
      %2009 = vmatprep.subr.bf16.mxu0 %v1822
      %2010 = vmatpush2.bf16.msra.mxu0 %v1821
      %2011 = vmatprep.subr.bf16.mxu0 %v1819
      %2012 = vmatpush2.bf16.msra.mxu0 %v1818
      %2013 = vmatprep.subr.bf16.mxu0 %v1816
      %2014 = vmatpush2.bf16.msra.mxu0 %v1815
      %2015 = vmatprep.mubr.bf16.mxu0 %v1456
      %2016 = vmatmul.mubr.bf16.gmra.mxu0 %v1455
      %v2017 = vpop.f32.mrf.mxu0
      %v2018 = vadd.f32 %v1414, %v2017
      %v2019 = vpop.f32.mrf.mxu0
      %v2020 = vadd.f32 %v1414, %v2019
      %v2021 = vpop.f32.mrf.mxu0
      %v2022 = vadd.f32 %v1419, %v2021
      %v2023 = vpop.f32.mrf.mxu0
      %v2024 = vadd.f32 %v1419, %v2023
      %2025 = vmatprep.mubr.bf16.mxu0 %v1460
      %2026 = vmatmul.mubr.bf16.gmra.mxu0 %v1459
      %v2027 = vpop.f32.mrf.mxu0
      %v2028 = vadd.f32 %v1424, %v2027
      %v2029 = vpop.f32.mrf.mxu0
      %v2030 = vadd.f32 %v1424, %v2029
      %v2031 = vpop.f32.mrf.mxu0
      %v2032 = vadd.f32 %v1429, %v2031
      %v2033 = vpop.f32.mrf.mxu0
      %v2034 = vadd.f32 %v1429, %v2033
      %2035 = vdwg.mxu0
      %2036 = vmatprep.subr.bf16.mxu0 %v1861
      %2037 = vmatpush1.bf16.msra.mxu0 %v1860
      %2038 = vmatprep.subr.bf16.mxu0 %v1858
      %2039 = vmatpush1.bf16.msra.mxu0 %v1857
      %2040 = vmatprep.subr.bf16.mxu0 %v1855
      %2041 = vmatpush1.bf16.msra.mxu0 %v1854
      %2042 = vmatprep.subr.bf16.mxu0 %v1852
      %2043 = vmatpush1.bf16.msra.mxu0 %v1851
      %2044 = vmatprep.subr.bf16.mxu0 %v1849
      %2045 = vmatpush1.bf16.msra.mxu0 %v1848
      %2046 = vmatprep.subr.bf16.mxu0 %v1846
      %2047 = vmatpush1.bf16.msra.mxu0 %v1845
      %2048 = vmatprep.subr.bf16.mxu0 %v1843
      %2049 = vmatpush1.bf16.msra.mxu0 %v1842
      %2050 = vmatprep.subr.bf16.mxu0 %v1840
      %2051 = vmatpush1.bf16.msra.mxu0 %v1839
      %2052 = vmatprep.subr.bf16.mxu0 %v1885
      %2053 = vmatpush2.bf16.msra.mxu0 %v1884
      %2054 = vmatprep.subr.bf16.mxu0 %v1882
      %2055 = vmatpush2.bf16.msra.mxu0 %v1881
      %2056 = vmatprep.subr.bf16.mxu0 %v1879
      %2057 = vmatpush2.bf16.msra.mxu0 %v1878
      %2058 = vmatprep.subr.bf16.mxu0 %v1876
      %2059 = vmatpush2.bf16.msra.mxu0 %v1875
      %2060 = vmatprep.subr.bf16.mxu0 %v1873
      %2061 = vmatpush2.bf16.msra.mxu0 %v1872
      %2062 = vmatprep.subr.bf16.mxu0 %v1870
      %2063 = vmatpush2.bf16.msra.mxu0 %v1869
      %2064 = vmatprep.subr.bf16.mxu0 %v1867
      %2065 = vmatpush2.bf16.msra.mxu0 %v1866
      %2066 = vmatprep.subr.bf16.mxu0 %v1864
      %2067 = vmatpush2.bf16.msra.mxu0 %v1863
      %2068 = vmatprep.mubr.bf16.mxu0 %v1458
      %2069 = vmatmul.mubr.bf16.gmra.mxu0 %v1457
      %v2070 = vpop.f32.mrf.mxu0
      %v2071 = vadd.f32 %v2018, %v2070
      %v2072 = vpop.f32.mrf.mxu0
      %v2073 = vadd.f32 %v2020, %v2072
      %v2074 = vpop.f32.mrf.mxu0
      %v2075 = vadd.f32 %v2022, %v2074
      %v2076 = vpop.f32.mrf.mxu0
      %v2077 = vadd.f32 %v2024, %v2076
      %2078 = vmatprep.mubr.bf16.mxu0 %v1462
      %2079 = vmatmul.mubr.bf16.gmra.mxu0 %v1461
      %v2080 = vpop.f32.mrf.mxu0
      %v2081 = vadd.f32 %v2028, %v2080
      %v2082 = vpop.f32.mrf.mxu0
      %v2083 = vadd.f32 %v2030, %v2082
      %v2084 = vpop.f32.mrf.mxu0
      %v2085 = vadd.f32 %v2032, %v2084
      %v2086 = vpop.f32.mrf.mxu0
      %v2087 = vadd.f32 %v2034, %v2086
      %2088 = vdwg.mxu0
      %2089 = vmatprep.subr.bf16.mxu0 0
      %2090 = vmatpush1.bf16.msra.mxu0 %v1814
      %2091 = vmatprep.subr.bf16.mxu0 0
      %2092 = vmatpush1.bf16.msra.mxu0 %v1811
      %2093 = vmatprep.subr.bf16.mxu0 0
      %2094 = vmatpush1.bf16.msra.mxu0 %v1808
      %2095 = vmatprep.subr.bf16.mxu0 0
      %2096 = vmatpush1.bf16.msra.mxu0 %v1805
      %2097 = vmatprep.subr.bf16.mxu0 0
      %2098 = vmatpush1.bf16.msra.mxu0 %v1802
      %2099 = vmatprep.subr.bf16.mxu0 0
      %2100 = vmatpush1.bf16.msra.mxu0 %v1799
      %2101 = vmatprep.subr.bf16.mxu0 0
      %2102 = vmatpush1.bf16.msra.mxu0 %v1796
      %2103 = vmatprep.subr.bf16.mxu0 0
      %2104 = vmatpush1.bf16.msra.mxu0 %v1793
      %2105 = vmatprep.subr.bf16.mxu0 0
      %2106 = vmatpush2.bf16.msra.mxu0 %v1838
      %2107 = vmatprep.subr.bf16.mxu0 0
      %2108 = vmatpush2.bf16.msra.mxu0 %v1835
      %2109 = vmatprep.subr.bf16.mxu0 0
      %2110 = vmatpush2.bf16.msra.mxu0 %v1832
      %2111 = vmatprep.subr.bf16.mxu0 0
      %2112 = vmatpush2.bf16.msra.mxu0 %v1829
      %2113 = vmatprep.subr.bf16.mxu0 0
      %2114 = vmatpush2.bf16.msra.mxu0 %v1826
      %2115 = vmatprep.subr.bf16.mxu0 0
      %2116 = vmatpush2.bf16.msra.mxu0 %v1823
      %2117 = vmatprep.subr.bf16.mxu0 0
      %2118 = vmatpush2.bf16.msra.mxu0 %v1820
      %2119 = vmatprep.subr.bf16.mxu0 0
      %2120 = vmatpush2.bf16.msra.mxu0 %v1817
      %2121 = vmatprep.mubr.bf16.mxu0 %v1456
      %2122 = vmatmul.mubr.bf16.gmra.mxu0 %v1455
      %v2123 = vpop.f32.mrf.mxu0
      %v2124 = vadd.f32 %v1414, %v2123
      %v2125 = vpop.f32.mrf.mxu0
      %v2126 = vpop.f32.mrf.mxu0
      %v2127 = vadd.f32 %v1419, %v2126
      %v2128 = vpop.f32.mrf.mxu0
      %2129 = vmatprep.mubr.bf16.mxu0 %v1460
      %2130 = vmatmul.mubr.bf16.gmra.mxu0 %v1459
      %v2131 = vpop.f32.mrf.mxu0
      %v2132 = vadd.f32 %v1424, %v2131
      %v2133 = vpop.f32.mrf.mxu0
      %v2134 = vpop.f32.mrf.mxu0
      %v2135 = vadd.f32 %v1429, %v2134
      %v2136 = vpop.f32.mrf.mxu0
      %2137 = vdwg.mxu0
      %2138 = vmatprep.subr.bf16.mxu0 0
      %2139 = vmatpush1.bf16.msra.mxu0 %v1862
      %2140 = vmatprep.subr.bf16.mxu0 0
      %2141 = vmatpush1.bf16.msra.mxu0 %v1859
      %2142 = vmatprep.subr.bf16.mxu0 0
      %2143 = vmatpush1.bf16.msra.mxu0 %v1856
      %2144 = vmatprep.subr.bf16.mxu0 0
      %2145 = vmatpush1.bf16.msra.mxu0 %v1853
      %2146 = vmatprep.subr.bf16.mxu0 0
      %2147 = vmatpush1.bf16.msra.mxu0 %v1850
      %2148 = vmatprep.subr.bf16.mxu0 0
      %2149 = vmatpush1.bf16.msra.mxu0 %v1847
      %2150 = vmatprep.subr.bf16.mxu0 0
      %2151 = vmatpush1.bf16.msra.mxu0 %v1844
      %2152 = vmatprep.subr.bf16.mxu0 0
      %2153 = vmatpush1.bf16.msra.mxu0 %v1841
      %2154 = vmatprep.subr.bf16.mxu0 0
      %2155 = vmatpush2.bf16.msra.mxu0 %v1886
      %2156 = vmatprep.subr.bf16.mxu0 0
      %2157 = vmatpush2.bf16.msra.mxu0 %v1883
      %2158 = vmatprep.subr.bf16.mxu0 0
      %2159 = vmatpush2.bf16.msra.mxu0 %v1880
      %2160 = vmatprep.subr.bf16.mxu0 0
      %2161 = vmatpush2.bf16.msra.mxu0 %v1877
      %2162 = vmatprep.subr.bf16.mxu0 0
      %2163 = vmatpush2.bf16.msra.mxu0 %v1874
      %2164 = vmatprep.subr.bf16.mxu0 0
      %2165 = vmatpush2.bf16.msra.mxu0 %v1871
      %2166 = vmatprep.subr.bf16.mxu0 0
      %2167 = vmatpush2.bf16.msra.mxu0 %v1868
      %2168 = vmatprep.subr.bf16.mxu0 0
      %2169 = vmatpush2.bf16.msra.mxu0 %v1865
      %2170 = vmatprep.mubr.bf16.mxu0 %v1458
      %2171 = vmatmul.mubr.bf16.gmra.mxu0 %v1457
      %v2172 = vpop.f32.mrf.mxu0
      %v2173 = vadd.f32 %v2124, %v2172
      %v2174 = vpop.f32.mrf.mxu0
      %v2175 = vpop.f32.mrf.mxu0
      %v2176 = vadd.f32 %v2127, %v2175
      %v2177 = vpop.f32.mrf.mxu0
      %2178 = vmatprep.mubr.bf16.mxu0 %v1462
      %2179 = vmatmul.mubr.bf16.gmra.mxu0 %v1461
      %v2180 = vpop.f32.mrf.mxu0
      %v2181 = vadd.f32 %v2132, %v2180
      %v2182 = vpop.f32.mrf.mxu0
      %v2183 = vpop.f32.mrf.mxu0
      %v2184 = vadd.f32 %v2135, %v2183
      %v2185 = vpop.f32.mrf.mxu0
      %2186 = vdwg.mxu0
      %v2187 = vld [vmem:[%s212] sm:$0xff]
      %v2188 = vld [vmem:[%s212 + $0x8] sm:$0xff]
      %v2189 = vld [vmem:[%s212 + $0x10] sm:$0xff]
      %v2190 = vld [vmem:[%s212 + $0x20] sm:$0xff]
      %v2191 = vld [vmem:[%s212 + $0x28] sm:$0xff]
      %v2192 = vld [vmem:[%s212 + $0x30] sm:$0xff]
      %v2193 = vld [vmem:[%s212 + $0x40] sm:$0xff]
      %v2194 = vld [vmem:[%s212 + $0x48] sm:$0xff]
      %v2195 = vld [vmem:[%s212 + $0x50] sm:$0xff]
      %v2196 = vld [vmem:[%s212 + $0x60] sm:$0xff]
      %v2197 = vld [vmem:[%s212 + $0x68] sm:$0xff]
      %v2198 = vld [vmem:[%s212 + $0x70] sm:$0xff]
      %v2199 = vadd.f32 %v2071, %v2187
      %v2200 = vadd.f32 %v2073, %v2188
      %v2201 = vadd.f32 %v2173, %v2189
      %v2202 = vadd.f32 %v2075, %v2190
      %v2203 = vadd.f32 %v2077, %v2191
      %v2204 = vadd.f32 %v2176, %v2192
      %v2205 = vadd.f32 %v2081, %v2193
      %v2206 = vadd.f32 %v2083, %v2194
      %v2207 = vadd.f32 %v2181, %v2195
      %v2208 = vadd.f32 %v2085, %v2196
      %v2209 = vadd.f32 %v2087, %v2197
      %v2210 = vadd.f32 %v2184, %v2198
      %2211 = vst [vmem:[%s217] sm:$0xff] %v2199
      %2212 = vst [vmem:[%s217 + $0x8] sm:$0xff] %v2200
      %2213 = vst [vmem:[%s217 + $0x10] sm:$0xff] %v2201
      %2214 = vst [vmem:[%s217 + $0x18] sm:$0xff] %v2202
      %2215 = vst [vmem:[%s217 + $0x20] sm:$0xff] %v2203
      %2216 = vst [vmem:[%s217 + $0x28] sm:$0xff] %v2204
      %2217 = vst [vmem:[%s217 + $0x30] sm:$0xff] %v2205
      %2218 = vst [vmem:[%s217 + $0x38] sm:$0xff] %v2206
      %2219 = vst [vmem:[%s217 + $0x40] sm:$0xff] %v2207
      %2220 = vst [vmem:[%s217 + $0x48] sm:$0xff] %v2208
      %2221 = vst [vmem:[%s217 + $0x50] sm:$0xff] %v2209
      %2222 = vst [vmem:[%s217 + $0x58] sm:$0xff] %v2210
      %p2223 = scmp.lt.s32.totalorder %s15, 1
      %s2224 = scalar_select %p2223, %s15, 1
      %s2225 = smul.addr %s2224, 12
      %s2226 = smul.addr %s2225, 8
      %s2227 = scalar_lea.vmem %s4, %s2226
      // Predicated region
      $region37: #{residual_forward.3} parent=35 // pred_check
        %p2228 = pneg %p127
      $region38: #{residual_forward.3} parent=35 // pred_check_branch
        %2230 = sbr.rel (%p2228) target = $region40
      $region39: #{residual_forward.3} parent=35 // pred_region
        _
      $region40: #{residual_forward.3} parent=35 // pred_fallthru
        _
    $region36: #{residual_forward.3} parent=5 // pred_fallthru
      _
    %p2231 = scmp.le.s32.totalorder 2, %s10
    // Predicated region
    $region41: #{residual_forward.3} parent=5 // pred_check
      %p2232 = pneg %p2231
    $region42: #{residual_forward.3} parent=5 // pred_check_branch
      %2234 = sbr.rel (%p2232) target = $region44
    $region43: #{residual_forward.3} parent=5 // pred_region
      %s2235 = ssub.s32 %s10, 2
      // Predicated region
      $region45: #{residual_forward.3} parent=43 // pred_check
        %p2236 = pneg %p133
      $region46: #{residual_forward.3} parent=43 // pred_check_branch
        %2238 = sbr.rel (%p2236) target = $region48
      $region47: #{residual_forward.3} parent=43 // pred_region
        %p2239 = scmp.lt.s32.totalorder %s16, 1
        %s2240 = scalar_select %p2239, %s16, 1
        %s2241 = smul.addr %s2240, 12
        %s2242 = smul.addr %s2241, 8
        %s2243 = scalar_lea.vmem %s4, %s2242
      $region48: #{residual_forward.3} parent=43 // pred_fallthru
        _
    $region44: #{residual_forward.3} parent=5 // pred_fallthru
      _
  $region6: #{residual_forward.3} parent=0 // loop_footer
    %s14 = sadd.s32 1, %s10
  $region7: #{residual_forward.3} parent=0 // loop_footer_branch
    %9 = sbr.rel target = $region3
  $region8: #{residual_forward.3} parent=0 // loop_exit
    _

</llo_original>
